<compile_context>
chip_gen: v6e
topology: v6e:2x2x1
jax: 0.10.0
libtpu: 0.0.40
codegen_flags: <defaults>
</compile_context>

<pallas_src>
import functools

import jax
import jax.numpy as jnp
from jax.experimental import pallas as pl
from jax.experimental.pallas import tpu as pltpu


_LANE = 128                              # channel dims padded to multiples of this
_TM = 512                                # node-row tile (tiled streaming path)
_TK = 2048                               # contraction (neighbor) tile
_N_ALIGN_TILED = 2048                    # lcm(_TM, _TK)
_N_ALIGN_FUSED = 256                     # node padding for the A-resident path
_TM_LIN = 256                            # row tile for the small linear kernels
_VMEM_LIMIT_TILED = 32 * 1024 * 1024     # safe on v5e/v6e/v7x
_VMEM_LIMIT_FUSED = 48 * 1024 * 1024     # < v7x 64 MiB physical, with headroom
_FUSED_VMEM_BUDGET = 40 * 1024 * 1024    # gate for choosing the fused path
_X_RESIDENT_MAX_BYTES = 10 * 1024 * 1024 # budget for whole-X residency (tiled path)


def _round_up(x, m):
    return ((x + m - 1) // m) * m


def _pad2(x, rows, cols, dtype):
    out = jnp.zeros((rows, cols), dtype)
    return out.at[: x.shape[0], : x.shape[1]].set(x.astype(dtype))


# ----------------------------- Pallas kernels ------------------------------

def _gcn_kernel(a_ref, x_ref, w_ref, b_ref, o_ref, acc_ref, *,
                apply_relu, tk, x_resident):
    """One (TM, TK) step of   out = relu?((A @ X) @ W + b).

    A@X is accumulated in an f32 VMEM scratch across the k grid axis; the
    small @W + bias (+ ReLU) epilogue is fused into the last k step.
    When x_resident, X lives whole in VMEM and is sliced by the k index
    (fetched from HBM once instead of once per row tile).
    """
    k = pl.program_id(1)

    @pl.when(k == 0)
    def _():
        acc_ref[...] = jnp.zeros_like(acc_ref)

    if x_resident:
        start = pl.multiple_of(k * tk, tk)
        x_blk = x_ref[pl.ds(start, tk), :]
    else:
        x_blk = x_ref[...]

    acc_ref[...] += jnp.dot(a_ref[...], x_blk,
                            preferred_element_type=jnp.float32)

    @pl.when(k == pl.num_programs(1) - 1)
    def _():
        agg = acc_ref[...].astype(w_ref.dtype)
        out = jnp.dot(agg, w_ref[...],
                      preferred_element_type=jnp.float32) + b_ref[...]
        if apply_relu:
            out = jnp.maximum(out, 0.0)
        o_ref[...] = out.astype(o_ref.dtype)


def _branch_fused_kernel(*refs, num_convs, heterophily, h_pad):
    """Whole DeltaGNN branch with A resident in VMEM (single pallas_call).

    refs = [A, X, (W_i, b_i) * num_convs, (merge_W, merge_b if heterophily), out]
    """
    a_ref = refs[0]
    x_ref = refs[1]
    conv_refs = [(refs[2 + 2 * i], refs[3 + 2 * i]) for i in range(num_convs)]
    idx = 2 + 2 * num_convs
    if heterophily:
        merge_w_ref, merge_b_ref = refs[idx], refs[idx + 1]
        idx += 2
    o_ref = refs[idx]

    num_layers = num_convs + 1

    def conv(cur, w_ref, b_ref, relu):
        agg = jnp.dot(a_ref[...], cur, preferred_element_type=jnp.float32)
        h = jnp.dot(agg.astype(w_ref.dtype), w_ref[...],
                    preferred_element_type=jnp.float32) + b_ref[...]
        if relu:
            h = jnp.maximum(h, 0.0)
        return h.astype(jnp.bfloat16)

    cur = x_ref[...]
    all_x = []
    for i in range(num_layers - 1):
        w_ref, b_ref = conv_refs[i]
        cur = conv(cur, w_ref, b_ref, relu=True)
        all_x.append(cur)
    # The PyTorch module re-applies convs[-1] (its last weight) once more,
    # without ReLU, as the final layer (convs has num_layers-1 entries).
    w_ref, b_ref = conv_refs[-1]
    cur = conv(cur, w_ref, b_ref, relu=False)
    all_x.append(cur)

    if heterophily:
        # merge = relu(concat(all_x) @ W_merge + b)  computed as a sum of
        # per-layer partial matmuls (no concatenated activation materialized).
        acc = jnp.dot(all_x[0], merge_w_ref[0:h_pad, :],
                      preferred_element_type=jnp.float32)
        for l in range(1, num_layers):
            wl = merge_w_ref[l * h_pad:(l + 1) * h_pad, :]
            acc = acc + jnp.dot(all_x[l], wl,
                                preferred_element_type=jnp.float32)
        acc = acc + merge_b_ref[...]
        o_ref[...] = jnp.maximum(acc, 0.0).astype(o_ref.dtype)
    else:
        o_ref[...] = cur.astype(o_ref.dtype)


def _linear_multi_kernel(*refs, num_inputs, apply_relu):
    """out = relu?(sum_i X_i @ W_i + b) -- concat-free linear layer."""
    xs = refs[:num_inputs]
    ws = refs[num_inputs:2 * num_inputs]
    b_ref = refs[2 * num_inputs]
    o_ref = refs[2 * num_inputs + 1]
    acc = jnp.dot(xs[0][...], ws[0][...], preferred_element_type=jnp.float32)
    for i in range(1, num_inputs):
        acc = acc + jnp.dot(xs[i][...], ws[i][...],
                            preferred_element_type=jnp.float32)
    acc = acc + b_ref[...]
    if apply_relu:
        acc = jnp.maximum(acc, 0.0)
    o_ref[...] = acc.astype(o_ref.dtype)


# ----------------------------- kernel wrappers ------------------------------

def gcn_layer(a, x, w, b, *, apply_relu, out_dtype=jnp.bfloat16):
    """Tiled streaming  out = relu?((A @ X) @ W + b)  for large graphs.

    Nodes pre-padded to a multiple of _N_ALIGN_TILED, channels to 128.
    (512, 2048) bf16 A tiles (2 MiB) + whole-X VMEM residency when it fits.
    """
    n = a.shape[0]
    c_in = x.shape[1]
    c_out = w.shape[1]
    tm = min(_TM, n)
    tk = min(_TK, n)
    assert n % tm == 0 and n % tk == 0
    grid = (n // tm, n // tk)

    x_resident = (n * c_in * x.dtype.itemsize) <= _X_RESIDENT_MAX_BYTES
    if x_resident:
        x_spec = pl.BlockSpec((n, c_in), lambda i, k: (0, 0))      # fetched once
    else:
        x_spec = pl.BlockSpec((tk, c_in), lambda i, k: (k, 0))

    return pl.pallas_call(
        functools.partial(_gcn_kernel, apply_relu=apply_relu, tk=tk,
                          x_resident=x_resident),
        out_shape=jax.ShapeDtypeStruct((n, c_out), out_dtype),
        grid_spec=pltpu.PrefetchScalarGridSpec(
            num_scalar_prefetch=0,
            grid=grid,
            in_specs=[
                pl.BlockSpec((tm, tk), lambda i, k: (i, k)),        # A tile
                x_spec,                                             # X
                pl.BlockSpec((c_in, c_out), lambda i, k: (0, 0)),   # W resident
                pl.BlockSpec((1, c_out), lambda i, k: (0, 0)),      # bias
            ],
            out_specs=pl.BlockSpec((tm, c_out), lambda i, k: (i, 0)),
            scratch_shapes=[pltpu.VMEM((tm, c_in), jnp.float32)],
        ),
        compiler_params=pltpu.CompilerParams(
            dimension_semantics=("parallel", "arbitrary"),
            vmem_limit_bytes=_VMEM_LIMIT_TILED,
        ),
    )(a, x, w, b)


def linear_multi(xs, ws, b, *, apply_relu, out_dtype=jnp.bfloat16):
    """out = relu?(sum_i X_i @ W_i + b), row-tiled, no HBM concat."""
    n = xs[0].shape[0]
    c_out = ws[0].shape[1]
    tm = min(_TM_LIN, n)
    assert n % tm == 0
    grid = (n // tm,)
    in_specs = [pl.BlockSpec((tm, int(x.shape[1])), lambda i: (i, 0)) for x in xs]
    in_specs += [pl.BlockSpec((int(w.shape[0]), c_out), lambda i: (0, 0)) for w in ws]
    in_specs += [pl.BlockSpec((1, c_out), lambda i: (0, 0))]
    return pl.pallas_call(
        functools.partial(_linear_multi_kernel, num_inputs=len(xs),
                          apply_relu=apply_relu),
        out_shape=jax.ShapeDtypeStruct((n, c_out), out_dtype),
        grid_spec=pltpu.PrefetchScalarGridSpec(
            num_scalar_prefetch=0,
            grid=grid,
            in_specs=in_specs,
            out_specs=pl.BlockSpec((tm, c_out), lambda i: (i, 0)),
        ),
        compiler_params=pltpu.CompilerParams(
            dimension_semantics=("parallel",),
            vmem_limit_bytes=_VMEM_LIMIT_TILED,
        ),
    )(*xs, *ws, b)


def _fused_vmem_bytes(n_pad, in_pad, h_pad, num_layers):
    """Conservative VMEM estimate for the A-resident fused branch kernel."""
    c_max = max(in_pad, h_pad)
    a_bytes = n_pad * n_pad * 2
    x_bytes = n_pad * in_pad * 2
    act_bytes = num_layers * n_pad * h_pad * 2
    tmp_f32 = 2 * n_pad * c_max * 4
    w_bytes = (in_pad * h_pad + (2 * num_layers - 2) * h_pad * h_pad) * 2
    return 2 * a_bytes + 2 * x_bytes + act_bytes + tmp_f32 + w_bytes + (2 << 20)


# ------------------------------ glue (JAX) ---------------------------------

def normalized_adjacency(edge_index, n, n_pad):
    """Dense GCN-normalized adjacency D^{-1/2}(A+I)D^{-1/2}, built directly at
    (n_pad, n_pad) and cast to bf16 (entries are in [0, 1])."""
    row, col = edge_index[0], edge_index[1]
    a = jnp.zeros((n_pad, n_pad), jnp.float32)
    a = a.at[row, col].set(1.0)
    a = a.at[col, row].set(1.0)                      # undirected
    idx = jnp.arange(n)
    a = a.at[idx, idx].set(1.0)                      # self loops (real nodes)
    deg = a.sum(axis=1)
    d_inv_sqrt = jnp.where(deg > 0, 1.0 / jnp.sqrt(deg), 0.0)
    a = a * d_inv_sqrt[:, None] * d_inv_sqrt[None, :]
    return a.astype(jnp.bfloat16)


def init_linear(key, fan_in, fan_out):
    k1, k2 = jax.random.split(key)
    bound = 1.0 / jnp.sqrt(jnp.float32(fan_in))
    w = jax.random.uniform(k1, (fan_in, fan_out), jnp.float32, -bound, bound)
    b = jax.random.uniform(k2, (1, fan_out), jnp.float32, -bound, bound)
    return w, b


class DeltaGNNPallas:
    """JAX/Pallas re-implementation of DeltaGNN.forward (flow_flag=False,
    residual=False, batch_norm=False, dropout inactive at eval).

    Weights are padded once at init to lane-dense (multiple-of-128) channel
    dims; zero padding keeps the padded channels exactly zero through every
    layer so the unpadded slice of the output is unchanged.
    """

    def __init__(self, hidden_channels, num_layers, in_channels, out_channels, key):
        self.hidden_channels = hidden_channels
        self.num_layers = num_layers
        self.in_channels = in_channels
        self.out_channels = out_channels

        self.in_pad = _round_up(in_channels, _LANE)
        self.h_pad = _round_up(hidden_channels, _LANE)
        self.out_pad = _round_up(out_channels, _LANE)

        keys = jax.random.split(key, 2 * (num_layers - 1) + 2)
        ki = 0

        # convs_a / convs_b : [in -> hidden] + (num_layers-2) * [hidden -> hidden]
        dims = [(in_channels, hidden_channels)] + \
               [(hidden_channels, hidden_channels)] * (num_layers - 2)
        pad_dims = [(self.in_pad, self.h_pad)] + \
                   [(self.h_pad, self.h_pad)] * (num_layers - 2)

        def make_conv(k, ci, co, ci_p, co_p):
            w, b = init_linear(k, ci, co)
            return (_pad2(w, ci_p, co_p, jnp.bfloat16),
                    _pad2(b, 1, co_p, jnp.float32))

        self.convs_a = [make_conv(keys[ki + i], *dims[i], *pad_dims[i])
                        for i in range(num_layers - 1)]
        ki += num_layers - 1
        self.convs_b = [make_conv(keys[ki + i], *dims[i], *pad_dims[i])
                        for i in range(num_layers - 1)]
        ki += num_layers - 1

        # merge_layer_b : Linear(num_layers * hidden, hidden) — padded so that
        # each per-layer slab lines up with the padded activations.
        mw, mb = init_linear(keys[ki], num_layers * hidden_channels,
                             hidden_channels)
        ki += 1
        mw_pad = jnp.zeros((num_layers * self.h_pad, self.h_pad), jnp.bfloat16)
        for i in range(num_layers):
            sl = mw[i * hidden_channels:(i + 1) * hidden_channels, :]
            mw_pad = mw_pad.at[i * self.h_pad:i * self.h_pad + hidden_channels,
                               :hidden_channels].set(sl.astype(jnp.bfloat16))
        self.merge_w = mw_pad
        self.merge_b = _pad2(mb, 1, self.h_pad, jnp.float32)

        # output_layer : Linear(2 * hidden, out) — stored as two per-branch slabs.
        ow, ob = init_linear(keys[ki], 2 * hidden_channels, out_channels)
        ow_pad = jnp.zeros((2 * self.h_pad, self.out_pad), jnp.bfloat16)
        ow_pad = ow_pad.at[:hidden_channels, :out_channels].set(
            ow[:hidden_channels].astype(jnp.bfloat16))
        ow_pad = ow_pad.at[self.h_pad:self.h_pad + hidden_channels,
                           :out_channels].set(
            ow[hidden_channels:].astype(jnp.bfloat16))
        self.out_w_a = ow_pad[:self.h_pad]
        self.out_w_b = ow_pad[self.h_pad:]
        self.out_b = _pad2(ob, 1, self.out_pad, jnp.float32)

    # -- A-resident fused branch (adjacency fits in VMEM) --------------------
    def _branch_fused(self, x, a, convs, heterophily):
        n_pad = a.shape[0]
        args = [a, x]
        for w, b in convs:
            args.extend([w, b])
        if heterophily:
            args.extend([self.merge_w, self.merge_b])
        kernel = functools.partial(
            _branch_fused_kernel, num_convs=len(convs),
            heterophily=heterophily, h_pad=self.h_pad)
        return pl.pallas_call(
            kernel,
            out_shape=jax.ShapeDtypeStruct((n_pad, self.h_pad), jnp.bfloat16),
            in_specs=[pl.BlockSpec(memory_space=pltpu.MemorySpace.VMEM)
                      for _ in args],
            out_specs=pl.BlockSpec(memory_space=pltpu.MemorySpace.VMEM),
            compiler_params=pltpu.CompilerParams(
                vmem_limit_bytes=_VMEM_LIMIT_FUSED),
        )(*args)

    # -- streaming fallback for graphs too large for VMEM-resident A ---------
    def _branch_tiled(self, x, a, convs, heterophily):
        all_x = []
        for i in range(self.num_layers - 1):
            w, b = convs[i]
            x = gcn_layer(a, x, w, b, apply_relu=True)
            all_x.append(x)
        w, b = convs[-1]
        x = gcn_layer(a, x, w, b, apply_relu=False)
        all_x.append(x)
        if heterophily:
            ws = [self.merge_w[l * self.h_pad:(l + 1) * self.h_pad]
                  for l in range(self.num_layers)]
            x = linear_multi(all_x, ws, self.merge_b, apply_relu=True)
        return x

    def forward(self, x, edge_index_a, edge_index_b):
        n = x.shape[0]
        n_pad_fused = _round_up(max(n, 1), _N_ALIGN_FUSED)
        use_fused = _fused_vmem_bytes(n_pad_fused, self.in_pad, self.h_pad,
                                      self.num_layers) <= _FUSED_VMEM_BUDGET
        n_pad = n_pad_fused if use_fused else _round_up(n, _N_ALIGN_TILED)

        x_pad = _pad2(x, n_pad, self.in_pad, jnp.bfloat16)
        adj_a = normalized_adjacency(edge_index_a, n, n_pad)
        adj_b = normalized_adjacency(edge_index_b, n, n_pad)

        if use_fused:
            x_a = self._branch_fused(x_pad, adj_a, self.convs_a, heterophily=False)
            x_b = self._branch_fused(x_pad, adj_b, self.convs_b, heterophily=True)
        else:
            x_a = self._branch_tiled(x_pad, adj_a, self.convs_a, heterophily=False)
            x_b = self._branch_tiled(x_pad, adj_b, self.convs_b, heterophily=True)

        # output_layer(concat(x_a, x_b)) as a concat-free partial matmul.
        out_pad = linear_multi([x_a, x_b], [self.out_w_a, self.out_w_b],
                               self.out_b, apply_relu=False,
                               out_dtype=jnp.float32)
        out = out_pad[:n, :self.out_channels]
        scores_means = []                                # flow_flag=False
        return out, scores_means, [edge_index_a, edge_index_a, edge_index_b]


# ----------------------- pure-JAX reference (testing) ----------------------

def reference_forward(model, x, edge_index_a, edge_index_b):
    """f32 JAX reference mimicking the kernel's bf16 rounding points."""
    n = x.shape[0]
    x_p = _pad2(x, n, model.in_pad, jnp.bfloat16).astype(jnp.float32)
    adj_a = normalized_adjacency(edge_index_a, n, n).astype(jnp.float32)
    adj_b = normalized_adjacency(edge_index_b, n, n).astype(jnp.float32)

    def conv(a, cur, w, b, relu):
        agg = (a @ cur).astype(jnp.bfloat16).astype(jnp.float32)
        h = agg @ w.astype(jnp.float32) + b
        if relu:
            h = jnp.maximum(h, 0.0)
        return h.astype(jnp.bfloat16).astype(jnp.float32)

    def branch(a, convs, hetero):
        cur = x_p
        all_x = []
        for i in range(model.num_layers - 1):
            w, b = convs[i]
            cur = conv(a, cur, w, b, True)
            all_x.append(cur)
        w, b = convs[-1]
        cur = conv(a, cur, w, b, False)
        all_x.append(cur)
        if hetero:
            merged = (jnp.concatenate(all_x, axis=1)
                      @ model.merge_w.astype(jnp.float32) + model.merge_b)
            merged = jnp.maximum(merged, 0.0)
            return merged.astype(jnp.bfloat16).astype(jnp.float32)
        return cur

    xa = branch(adj_a, model.convs_a, False)
    xb = branch(adj_b, model.convs_b, True)
    out = (xa @ model.out_w_a.astype(jnp.float32)
           + xb @ model.out_w_b.astype(jnp.float32) + model.out_b)
    return out[:, :model.out_channels]


# --------------------------------- main -------------------------------------

if __name__ == "__main__":
    key = jax.random.PRNGKey(0)
    k_x, k_ea, k_eb, k_params, k_a2, k_x2, k_w2, k_b2 = jax.random.split(key, 8)

    N = 16            # nodes
    IN_CH = 8
    HIDDEN = 32
    OUT_CH = 4
    NUM_LAYERS = 3
    N_EDGES = 40

    x = jax.random.normal(k_x, (N, IN_CH), jnp.float32)
    edge_index_a = jax.random.randint(k_ea, (2, N_EDGES), 0, N, dtype=jnp.int32)
    edge_index_b = jax.random.randint(k_eb, (2, N_EDGES), 0, N, dtype=jnp.int32)

    model = DeltaGNNPallas(HIDDEN, NUM_LAYERS, IN_CH, OUT_CH, k_params)
    out, scores_means, edge_lists = model.forward(x, edge_index_a, edge_index_b)
    out = jax.block_until_ready(out)

    assert out.shape == (N, OUT_CH), out.shape
    assert out.dtype == jnp.float32
    assert bool(jnp.all(jnp.isfinite(out)))

    # Numeric check against a pure-JAX reference (loose tolerance; bf16 path).
    ref = jax.block_until_ready(
        reference_forward(model, x, edge_index_a, edge_index_b))
    err = float(jnp.max(jnp.abs(out - ref)))
    tol = 5e-2 * (float(jnp.max(jnp.abs(ref))) + 1.0)
    assert err <= tol, (err, tol)

    # Smoke-test the large-graph tiled streaming path (not used by the small
    # model above): one GCN layer at 2048 nodes with the bigger tiles and
    # VMEM-resident X.
    n_big, c_big = 2048, 128
    a_big = (jax.random.uniform(k_a2, (n_big, n_big), jnp.float32) * 0.02
             ).astype(jnp.bfloat16)
    x_big = jax.random.normal(k_x2, (n_big, c_big), jnp.float32
                              ).astype(jnp.bfloat16)
    w_big = (jax.random.normal(k_w2, (c_big, c_big), jnp.float32) * 0.05
             ).astype(jnp.bfloat16)
    b_big = jax.random.normal(k_b2, (1, c_big), jnp.float32) * 0.1
    y_tiled = jax.block_until_ready(
        gcn_layer(a_big, x_big, w_big, b_big, apply_relu=True))
    agg_ref = (a_big.astype(jnp.float32) @ x_big.astype(jnp.float32)
               ).astype(jnp.bfloat16).astype(jnp.float32)
    y_ref = jnp.maximum(agg_ref @ w_big.astype(jnp.float32) + b_big, 0.0)
    err2 = float(jnp.max(jnp.abs(y_tiled.astype(jnp.float32) - y_ref)))
    tol2 = 2e-2 * (float(jnp.max(jnp.abs(y_ref))) + 1.0)
    assert err2 <= tol2, (err2, tol2)

    print("KERNEL_OK")
</pallas_src>

<mosaic_0001>
module attributes {stable_mosaic.version = 11 : i64} {
  func.func @_branch_fused_kernel(%arg0: memref<256x256xbf16, #tpu.memory_space<vmem>>, %arg1: memref<256x128xbf16, #tpu.memory_space<vmem>>, %arg2: memref<128x128xbf16, #tpu.memory_space<vmem>>, %arg3: memref<1x128xf32, #tpu.memory_space<vmem>>, %arg4: memref<128x128xbf16, #tpu.memory_space<vmem>>, %arg5: memref<1x128xf32, #tpu.memory_space<vmem>>, %arg6: memref<256x128xbf16, #tpu.memory_space<vmem>>) attributes {dimension_semantics = [], scalar_prefetch = 0 : i64, scratch_operands = 0 : i64, tpu.core_type = #tpu.core_type<tc>} {
    %c0 = arith.constant 0 : index
    %c0_0 = arith.constant 0 : index
    %0 = vector.load %arg1[%c0, %c0_0] : memref<256x128xbf16, #tpu.memory_space<vmem>>, vector<256x128xbf16>
    %c0_1 = arith.constant 0 : index
    %c0_2 = arith.constant 0 : index
    %1 = vector.load %arg0[%c0_1, %c0_2] : memref<256x256xbf16, #tpu.memory_space<vmem>>, vector<256x256xbf16>
    %cst = arith.constant dense<0.000000e+00> : vector<256x128xf32>
    %2 = tpu.matmul %1, %0, %cst {dimension_numbers = #tpu.dot_dimension_numbers<[1], [0], [0], [1], [0, 0, 1, 1], [], []>} : vector<256x256xbf16>, vector<256x128xbf16>, vector<256x128xf32> -> vector<256x128xf32>
    %3 = arith.truncf %2 : vector<256x128xf32> to vector<256x128xbf16>
    %c0_3 = arith.constant 0 : index
    %c0_4 = arith.constant 0 : index
    %4 = vector.load %arg2[%c0_3, %c0_4] : memref<128x128xbf16, #tpu.memory_space<vmem>>, vector<128x128xbf16>
    %cst_5 = arith.constant dense<0.000000e+00> : vector<256x128xf32>
    %5 = tpu.matmul %3, %4, %cst_5 {dimension_numbers = #tpu.dot_dimension_numbers<[1], [0], [0], [1], [0, 0, 1, 1], [], []>} : vector<256x128xbf16>, vector<128x128xbf16>, vector<256x128xf32> -> vector<256x128xf32>
    %c0_6 = arith.constant 0 : index
    %c0_7 = arith.constant 0 : index
    %6 = vector.load %arg3[%c0_6, %c0_7] : memref<1x128xf32, #tpu.memory_space<vmem>>, vector<1x128xf32>
    %7 = vector.broadcast %6 : vector<1x128xf32> to vector<256x128xf32>
    %8 = arith.addf %5, %7 : vector<256x128xf32>
    %cst_8 = arith.constant 0.000000e+00 : f32
    %9 = vector.broadcast %cst_8 : f32 to vector<256x128xf32>
    %10 = arith.maximumf %8, %9 : vector<256x128xf32>
    %11 = arith.truncf %10 : vector<256x128xf32> to vector<256x128xbf16>
    %c0_9 = arith.constant 0 : index
    %c0_10 = arith.constant 0 : index
    %12 = vector.load %arg0[%c0_9, %c0_10] : memref<256x256xbf16, #tpu.memory_space<vmem>>, vector<256x256xbf16>
    %cst_11 = arith.constant dense<0.000000e+00> : vector<256x128xf32>
    %13 = tpu.matmul %12, %11, %cst_11 {dimension_numbers = #tpu.dot_dimension_numbers<[1], [0], [0], [1], [0, 0, 1, 1], [], []>} : vector<256x256xbf16>, vector<256x128xbf16>, vector<256x128xf32> -> vector<256x128xf32>
    %14 = arith.truncf %13 : vector<256x128xf32> to vector<256x128xbf16>
    %c0_12 = arith.constant 0 : index
    %c0_13 = arith.constant 0 : index
    %15 = vector.load %arg4[%c0_12, %c0_13] : memref<128x128xbf16, #tpu.memory_space<vmem>>, vector<128x128xbf16>
    %cst_14 = arith.constant dense<0.000000e+00> : vector<256x128xf32>
    %16 = tpu.matmul %14, %15, %cst_14 {dimension_numbers = #tpu.dot_dimension_numbers<[1], [0], [0], [1], [0, 0, 1, 1], [], []>} : vector<256x128xbf16>, vector<128x128xbf16>, vector<256x128xf32> -> vector<256x128xf32>
    %c0_15 = arith.constant 0 : index
    %c0_16 = arith.constant 0 : index
    %17 = vector.load %arg5[%c0_15, %c0_16] : memref<1x128xf32, #tpu.memory_space<vmem>>, vector<1x128xf32>
    %18 = vector.broadcast %17 : vector<1x128xf32> to vector<256x128xf32>
    %19 = arith.addf %16, %18 : vector<256x128xf32>
    %cst_17 = arith.constant 0.000000e+00 : f32
    %20 = vector.broadcast %cst_17 : f32 to vector<256x128xf32>
    %21 = arith.maximumf %19, %20 : vector<256x128xf32>
    %22 = arith.truncf %21 : vector<256x128xf32> to vector<256x128xbf16>
    %c0_18 = arith.constant 0 : index
    %c0_19 = arith.constant 0 : index
    %23 = vector.load %arg0[%c0_18, %c0_19] : memref<256x256xbf16, #tpu.memory_space<vmem>>, vector<256x256xbf16>
    %cst_20 = arith.constant dense<0.000000e+00> : vector<256x128xf32>
    %24 = tpu.matmul %23, %22, %cst_20 {dimension_numbers = #tpu.dot_dimension_numbers<[1], [0], [0], [1], [0, 0, 1, 1], [], []>} : vector<256x256xbf16>, vector<256x128xbf16>, vector<256x128xf32> -> vector<256x128xf32>
    %25 = arith.truncf %24 : vector<256x128xf32> to vector<256x128xbf16>
    %c0_21 = arith.constant 0 : index
    %c0_22 = arith.constant 0 : index
    %26 = vector.load %arg4[%c0_21, %c0_22] : memref<128x128xbf16, #tpu.memory_space<vmem>>, vector<128x128xbf16>
    %cst_23 = arith.constant dense<0.000000e+00> : vector<256x128xf32>
    %27 = tpu.matmul %25, %26, %cst_23 {dimension_numbers = #tpu.dot_dimension_numbers<[1], [0], [0], [1], [0, 0, 1, 1], [], []>} : vector<256x128xbf16>, vector<128x128xbf16>, vector<256x128xf32> -> vector<256x128xf32>
    %c0_24 = arith.constant 0 : index
    %c0_25 = arith.constant 0 : index
    %28 = vector.load %arg5[%c0_24, %c0_25] : memref<1x128xf32, #tpu.memory_space<vmem>>, vector<1x128xf32>
    %29 = vector.broadcast %28 : vector<1x128xf32> to vector<256x128xf32>
    %30 = arith.addf %27, %29 : vector<256x128xf32>
    %31 = arith.truncf %30 : vector<256x128xf32> to vector<256x128xbf16>
    %c0_26 = arith.constant 0 : index
    %c0_27 = arith.constant 0 : index
    %32 = vector.load %arg6[%c0_26, %c0_27] : memref<256x128xbf16, #tpu.memory_space<vmem>>, vector<256x128xbf16>
    tpu.vector_store %arg6[%c0_26, %c0_27], %31 {strides = array<i32>} : memref<256x128xbf16, #tpu.memory_space<vmem>>, vector<256x128xbf16>,
    return
  }
}

</mosaic_0001>

<llo_original>
// kernel: tpu_custom_call.1
$region0: #{tpu_custom_call.1}
  #allocation0 [shape = 'u32[]', space=smem, size = 0x4, offset = 0x4, fixed_abs, tag = 'smem constant byte address 0x4 - core index']
  #allocation1 [shape = 'u32[144,128]{1,0:T(1,128)}', space=vmem, size = 0x12000, scoped, tag = 'internal scratch']
  %s0 = inlined_call_operand.hbm [shape: bf16[256,256], index: 0, kind: input, shape index: {}]
  %s1 = inlined_call_operand.hbm [shape: bf16[256,128], index: 1, kind: input, shape index: {}]
  %s2 = inlined_call_operand.hbm [shape: bf16[128,128], index: 2, kind: input, shape index: {}]
  %s3 = inlined_call_operand.vmem [shape: f32[1,128], index: 3, kind: input, shape index: {}]
  %s4 = inlined_call_operand.hbm [shape: bf16[128,128], index: 4, kind: input, shape index: {}]
  %s5 = inlined_call_operand.vmem [shape: f32[1,128], index: 5, kind: input, shape index: {}]
  %s6 = inlined_call_operand.hbm [shape: bf16[256,128], index: 6, kind: output, shape index: {}]
  %s7 = sld [smem:[#allocation0]]
  $region50: #{tpu_custom_call.1} parent=0
    _
  %s9 = ssub.s32 1, %s7
  %s10 = scalar_select 0, %s9, %s7
  $region1: #{tpu_custom_call.1} parent=0
    #allocation2 [shape = 'u8[131072]{0}', space=vmem, size = 0x20000, scoped, tag = 'input window, operand 0, single buffered']
    #allocation3 [shape = 's32[1]{0}', space=sflag, size = 0x4, scoped, tag = 'scoped memory for tpu_custom_call.1']
    #allocation4 [shape = 's32[1]{0}', space=sflag, size = 0x4, scoped, tag = 'scoped memory for tpu_custom_call.1']
    #allocation5 [shape = 'u8[65536]{0}', space=vmem, size = 0x10000, scoped, tag = 'input window, operand 1, single buffered']
    #allocation6 [shape = 's32[1]{0}', space=sflag, size = 0x4, scoped, tag = 'scoped memory for tpu_custom_call.1']
    #allocation7 [shape = 'u8[32768]{0}', space=vmem, size = 0x8000, scoped, tag = 'input window, operand 2, single buffered']
    #allocation8 [shape = 'u8[32768]{0}', space=vmem, size = 0x8000, scoped, tag = 'input window, operand 4, single buffered']
    #allocation9 [shape = 's32[1]{0}', space=sflag, size = 0x4, scoped, tag = 'scoped memory for tpu_custom_call.1']
    #allocation10 [shape = 'u8[65536]{0}', space=vmem, size = 0x10000, scoped, tag = 'output window, operand 0, single buffered']
    %11 = vsyncpa [#allocation3], 0
    %12 = vsyncpa [#allocation6], 0
    %13 = vsyncpa [#allocation9], 0
    %14 = vsyncpa [#allocation4], 0
    // Predicated region
    $region2: #{tpu_custom_call.1} parent=1 // pred_check
      _
    $region3: #{tpu_custom_call.1} parent=1 // pred_check_branch
      %16 = sbr.rel (0) target = $region5
    $region4: #{tpu_custom_call.1} parent=1 // pred_region
      %s18 = ssub.s32 4096, 4096
      %19 = vsyncadd [#allocation3], %s18
      %s20 = sshll.u32 [#allocation2], 4
      %s21 = int_to_ptr.vmem [resolvable:$true] %s20
      %26 = dma.hbm_to_vmem [thread:$0]  %s0, 4096, %s21, [#allocation3], 128, 128, 8
    $region5: #{tpu_custom_call.1} parent=1 // pred_fallthru
      _
    // Predicated region
    $region6: #{tpu_custom_call.1} parent=1 // pred_check
      _
    $region7: #{tpu_custom_call.1} parent=1 // pred_check_branch
      %28 = sbr.rel (0) target = $region9
    $region8: #{tpu_custom_call.1} parent=1 // pred_region
      %s30 = ssub.s32 2048, 2048
      %31 = vsyncadd [#allocation6], %s30
      %s32 = sshll.u32 [#allocation5], 4
      %s33 = int_to_ptr.vmem [resolvable:$true] %s32
      %38 = dma.hbm_to_vmem [thread:$0]  %s1, 2048, %s33, [#allocation6], 64, 64, 4
    $region9: #{tpu_custom_call.1} parent=1 // pred_fallthru
      _
    // Predicated region
    $region10: #{tpu_custom_call.1} parent=1 // pred_check
      _
    $region11: #{tpu_custom_call.1} parent=1 // pred_check_branch
      %40 = sbr.rel (0) target = $region13
    $region12: #{tpu_custom_call.1} parent=1 // pred_region
      %s42 = ssub.s32 1024, 1024
      %43 = vsyncadd [#allocation6], %s42
      %s44 = sshll.u32 [#allocation7], 4
      %s45 = int_to_ptr.vmem [resolvable:$true] %s44
      %50 = dma.hbm_to_vmem [thread:$0]  %s2, 1024, %s45, [#allocation6], 64, 64, 4
    $region13: #{tpu_custom_call.1} parent=1 // pred_fallthru
      _
    // Predicated region
    $region14: #{tpu_custom_call.1} parent=1 // pred_check
      _
    $region15: #{tpu_custom_call.1} parent=1 // pred_check_branch
      %52 = sbr.rel (0) target = $region17
    $region16: #{tpu_custom_call.1} parent=1 // pred_region
      _
    $region17: #{tpu_custom_call.1} parent=1 // pred_fallthru
      _
    // Predicated region
    $region18: #{tpu_custom_call.1} parent=1 // pred_check
      _
    $region19: #{tpu_custom_call.1} parent=1 // pred_check_branch
      %54 = sbr.rel (0) target = $region21
    $region20: #{tpu_custom_call.1} parent=1 // pred_region
      %s56 = ssub.s32 1024, 1024
      %57 = vsyncadd [#allocation9], %s56
      %s58 = sshll.u32 [#allocation8], 4
      %s59 = int_to_ptr.vmem [resolvable:$true] %s58
      %64 = dma.hbm_to_vmem [thread:$0]  %s4, 1024, %s59, [#allocation9], 64, 64, 4
    $region21: #{tpu_custom_call.1} parent=1 // pred_fallthru
      _
    // Predicated region
    $region22: #{tpu_custom_call.1} parent=1 // pred_check
      _
    $region23: #{tpu_custom_call.1} parent=1 // pred_check_branch
      %66 = sbr.rel (0) target = $region25
    $region24: #{tpu_custom_call.1} parent=1 // pred_region
      _
    $region25: #{tpu_custom_call.1} parent=1 // pred_fallthru
      _
    // Predicated region
    $region26: #{tpu_custom_call.1} parent=1 // pred_check
      _
    $region27: #{tpu_custom_call.1} parent=1 // pred_check_branch
      %68 = sbr.rel (0) target = $region29
    $region28: #{tpu_custom_call.1} parent=1 // pred_region
      %69 = dma.done [#allocation3], 4096
    $region29: #{tpu_custom_call.1} parent=1 // pred_fallthru
      _
    // Predicated region
    $region30: #{tpu_custom_call.1} parent=1 // pred_check
      _
    $region31: #{tpu_custom_call.1} parent=1 // pred_check_branch
      %71 = sbr.rel (0) target = $region33
    $region32: #{tpu_custom_call.1} parent=1 // pred_region
      %72 = dma.done [#allocation6], 2048
    $region33: #{tpu_custom_call.1} parent=1 // pred_fallthru
      _
    // Predicated region
    $region34: #{tpu_custom_call.1} parent=1 // pred_check
      _
    $region35: #{tpu_custom_call.1} parent=1 // pred_check_branch
      %74 = sbr.rel (0) target = $region37
    $region36: #{tpu_custom_call.1} parent=1 // pred_region
      %75 = dma.done [#allocation6], 1024
    $region37: #{tpu_custom_call.1} parent=1 // pred_fallthru
      _
    // Predicated region
    $region38: #{tpu_custom_call.1} parent=1 // pred_check
      _
    $region39: #{tpu_custom_call.1} parent=1 // pred_check_branch
      %77 = sbr.rel (0) target = $region41
    $region40: #{tpu_custom_call.1} parent=1 // pred_region
      %78 = dma.done [#allocation9], 1024
    $region41: #{tpu_custom_call.1} parent=1 // pred_fallthru
      _
    %v80 = vld [vmem:[#allocation5] sm:$0xf]
    %v81 = vld [vmem:[#allocation5 + $0x4] sm:$0xf]
    %v82 = vld [vmem:[#allocation5 + $0x8] sm:$0xf]
    %v83 = vld [vmem:[#allocation5 + $0xc] sm:$0xf]
    %v84 = vld [vmem:[#allocation5 + $0x10] sm:$0xf]
    %v85 = vld [vmem:[#allocation5 + $0x14] sm:$0xf]
    %v86 = vld [vmem:[#allocation5 + $0x18] sm:$0xf]
    %v87 = vld [vmem:[#allocation5 + $0x1c] sm:$0xf]
    %v88 = vld [vmem:[#allocation5 + $0x20] sm:$0xf]
    %v89 = vld [vmem:[#allocation5 + $0x24] sm:$0xf]
    %v90 = vld [vmem:[#allocation5 + $0x28] sm:$0xf]
    %v91 = vld [vmem:[#allocation5 + $0x2c] sm:$0xf]
    %v92 = vld [vmem:[#allocation5 + $0x30] sm:$0xf]
    %v93 = vld [vmem:[#allocation5 + $0x34] sm:$0xf]
    %v94 = vld [vmem:[#allocation5 + $0x38] sm:$0xf]
    %v95 = vld [vmem:[#allocation5 + $0x3c] sm:$0xf]
    %v96 = vld [vmem:[#allocation5 + $0x40] sm:$0xf]
    %v97 = vld [vmem:[#allocation5 + $0x44] sm:$0xf]
    %v98 = vld [vmem:[#allocation5 + $0x48] sm:$0xf]
    %v99 = vld [vmem:[#allocation5 + $0x4c] sm:$0xf]
    %v100 = vld [vmem:[#allocation5 + $0x50] sm:$0xf]
    %v101 = vld [vmem:[#allocation5 + $0x54] sm:$0xf]
    %v102 = vld [vmem:[#allocation5 + $0x58] sm:$0xf]
    %v103 = vld [vmem:[#allocation5 + $0x5c] sm:$0xf]
    %v104 = vld [vmem:[#allocation5 + $0x60] sm:$0xf]
    %v105 = vld [vmem:[#allocation5 + $0x64] sm:$0xf]
    %v106 = vld [vmem:[#allocation5 + $0x68] sm:$0xf]
    %v107 = vld [vmem:[#allocation5 + $0x6c] sm:$0xf]
    %v108 = vld [vmem:[#allocation5 + $0x70] sm:$0xf]
    %v109 = vld [vmem:[#allocation5 + $0x74] sm:$0xf]
    %v110 = vld [vmem:[#allocation5 + $0x78] sm:$0xf]
    %v111 = vld [vmem:[#allocation5 + $0x7c] sm:$0xf]
    %v112 = vld [vmem:[#allocation2] sm:$0xff]
    %v113 = vld [vmem:[#allocation2 + $0x8] sm:$0xff]
    %v114 = vld [vmem:[#allocation2 + $0x10] sm:$0xff]
    %v115 = vld [vmem:[#allocation2 + $0x18] sm:$0xff]
    %v116 = vld [vmem:[#allocation2 + $0x20] sm:$0xff]
    %v117 = vld [vmem:[#allocation2 + $0x28] sm:$0xff]
    %v118 = vld [vmem:[#allocation2 + $0x30] sm:$0xff]
    %v119 = vld [vmem:[#allocation2 + $0x38] sm:$0xff]
    %v120 = vld [vmem:[#allocation2 + $0x40] sm:$0xff]
    %v121 = vld [vmem:[#allocation2 + $0x48] sm:$0xff]
    %v122 = vld [vmem:[#allocation2 + $0x50] sm:$0xff]
    %v123 = vld [vmem:[#allocation2 + $0x58] sm:$0xff]
    %v124 = vld [vmem:[#allocation2 + $0x60] sm:$0xff]
    %v125 = vld [vmem:[#allocation2 + $0x68] sm:$0xff]
    %v126 = vld [vmem:[#allocation2 + $0x70] sm:$0xff]
    %v127 = vld [vmem:[#allocation2 + $0x78] sm:$0xff]
    %v128 = vld [vmem:[#allocation2 + $0x80] sm:$0xff]
    %v129 = vld [vmem:[#allocation2 + $0x88] sm:$0xff]
    %v130 = vld [vmem:[#allocation2 + $0x90] sm:$0xff]
    %v131 = vld [vmem:[#allocation2 + $0x98] sm:$0xff]
    %v132 = vld [vmem:[#allocation2 + $0xa0] sm:$0xff]
    %v133 = vld [vmem:[#allocation2 + $0xa8] sm:$0xff]
    %v134 = vld [vmem:[#allocation2 + $0xb0] sm:$0xff]
    %v135 = vld [vmem:[#allocation2 + $0xb8] sm:$0xff]
    %v136 = vld [vmem:[#allocation2 + $0xc0] sm:$0xff]
    %v137 = vld [vmem:[#allocation2 + $0xc8] sm:$0xff]
    %v138 = vld [vmem:[#allocation2 + $0xd0] sm:$0xff]
    %v139 = vld [vmem:[#allocation2 + $0xd8] sm:$0xff]
    %v140 = vld [vmem:[#allocation2 + $0xe0] sm:$0xff]
    %v141 = vld [vmem:[#allocation2 + $0xe8] sm:$0xff]
    %v142 = vld [vmem:[#allocation2 + $0xf0] sm:$0xff]
    %v143 = vld [vmem:[#allocation2 + $0xf8] sm:$0xff]
    %v176 = vunpack.c.l.b16 %v112
    %v177 = vunpack.c.h.b16 %v112
    %v178 = vunpack.c.l.b16 %v113
    %v179 = vunpack.c.h.b16 %v113
    %v180 = vunpack.c.l.b16 %v114
    %v181 = vunpack.c.h.b16 %v114
    %v182 = vunpack.c.l.b16 %v115
    %v183 = vunpack.c.h.b16 %v115
    %v184 = vunpack.c.l.b16 %v116
    %v185 = vunpack.c.h.b16 %v116
    %v186 = vunpack.c.l.b16 %v117
    %v187 = vunpack.c.h.b16 %v117
    %v188 = vunpack.c.l.b16 %v118
    %v189 = vunpack.c.h.b16 %v118
    %v190 = vunpack.c.l.b16 %v119
    %v191 = vunpack.c.h.b16 %v119
    %v192 = vunpack.c.l.b16 %v120
    %v193 = vunpack.c.h.b16 %v120
    %v194 = vunpack.c.l.b16 %v121
    %v195 = vunpack.c.h.b16 %v121
    %v196 = vunpack.c.l.b16 %v122
    %v197 = vunpack.c.h.b16 %v122
    %v198 = vunpack.c.l.b16 %v123
    %v199 = vunpack.c.h.b16 %v123
    %v200 = vunpack.c.l.b16 %v124
    %v201 = vunpack.c.h.b16 %v124
    %v202 = vunpack.c.l.b16 %v125
    %v203 = vunpack.c.h.b16 %v125
    %v204 = vunpack.c.l.b16 %v126
    %v205 = vunpack.c.h.b16 %v126
    %v206 = vunpack.c.l.b16 %v127
    %v207 = vunpack.c.h.b16 %v127
    %v208 = vunpack.c.l.b16 %v128
    %v209 = vunpack.c.h.b16 %v128
    %v210 = vunpack.c.l.b16 %v129
    %v211 = vunpack.c.h.b16 %v129
    %v212 = vunpack.c.l.b16 %v130
    %v213 = vunpack.c.h.b16 %v130
    %v214 = vunpack.c.l.b16 %v131
    %v215 = vunpack.c.h.b16 %v131
    %v216 = vunpack.c.l.b16 %v132
    %v217 = vunpack.c.h.b16 %v132
    %v218 = vunpack.c.l.b16 %v133
    %v219 = vunpack.c.h.b16 %v133
    %v220 = vunpack.c.l.b16 %v134
    %v221 = vunpack.c.h.b16 %v134
    %v222 = vunpack.c.l.b16 %v135
    %v223 = vunpack.c.h.b16 %v135
    %v224 = vunpack.c.l.b16 %v136
    %v225 = vunpack.c.h.b16 %v136
    %v226 = vunpack.c.l.b16 %v137
    %v227 = vunpack.c.h.b16 %v137
    %v228 = vunpack.c.l.b16 %v138
    %v229 = vunpack.c.h.b16 %v138
    %v230 = vunpack.c.l.b16 %v139
    %v231 = vunpack.c.h.b16 %v139
    %v232 = vunpack.c.l.b16 %v140
    %v233 = vunpack.c.h.b16 %v140
    %v234 = vunpack.c.l.b16 %v141
    %v235 = vunpack.c.h.b16 %v141
    %v236 = vunpack.c.l.b16 %v142
    %v237 = vunpack.c.h.b16 %v142
    %v238 = vunpack.c.l.b16 %v143
    %v239 = vunpack.c.h.b16 %v143
    %v240 = vpack.c.b16 %v178, %v176
    %v241 = vpack.c.b16 %v179, %v177
    %v242 = vpack.c.b16 %v182, %v180
    %v243 = vpack.c.b16 %v183, %v181
    %v244 = vpack.c.b16 %v186, %v184
    %v245 = vpack.c.b16 %v187, %v185
    %v246 = vpack.c.b16 %v190, %v188
    %v247 = vpack.c.b16 %v191, %v189
    %v248 = vpack.c.b16 %v194, %v192
    %v249 = vpack.c.b16 %v195, %v193
    %v250 = vpack.c.b16 %v198, %v196
    %v251 = vpack.c.b16 %v199, %v197
    %v252 = vpack.c.b16 %v202, %v200
    %v253 = vpack.c.b16 %v203, %v201
    %v254 = vpack.c.b16 %v206, %v204
    %v255 = vpack.c.b16 %v207, %v205
    %v256 = vpack.c.b16 %v210, %v208
    %v257 = vpack.c.b16 %v211, %v209
    %v258 = vpack.c.b16 %v214, %v212
    %v259 = vpack.c.b16 %v215, %v213
    %v260 = vpack.c.b16 %v218, %v216
    %v261 = vpack.c.b16 %v219, %v217
    %v262 = vpack.c.b16 %v222, %v220
    %v263 = vpack.c.b16 %v223, %v221
    %v264 = vpack.c.b16 %v226, %v224
    %v265 = vpack.c.b16 %v227, %v225
    %v266 = vpack.c.b16 %v230, %v228
    %v267 = vpack.c.b16 %v231, %v229
    %v268 = vpack.c.b16 %v234, %v232
    %v269 = vpack.c.b16 %v235, %v233
    %v270 = vpack.c.b16 %v238, %v236
    %v271 = vpack.c.b16 %v239, %v237
    %v336 = vunpack.c.l.b16 %v80
    %v337 = vunpack.c.l.b16 %v81
    %v338 = vunpack.c.l.b16 %v82
    %v339 = vunpack.c.l.b16 %v83
    %v340 = vunpack.c.l.b16 %v84
    %v341 = vunpack.c.l.b16 %v85
    %v342 = vunpack.c.l.b16 %v86
    %v343 = vunpack.c.l.b16 %v87
    %v344 = vunpack.c.l.b16 %v88
    %v345 = vunpack.c.l.b16 %v89
    %v346 = vunpack.c.l.b16 %v90
    %v347 = vunpack.c.l.b16 %v91
    %v348 = vunpack.c.l.b16 %v92
    %v349 = vunpack.c.l.b16 %v93
    %v350 = vunpack.c.l.b16 %v94
    %v351 = vunpack.c.l.b16 %v95
    %v352 = vunpack.c.l.b16 %v96
    %v353 = vunpack.c.l.b16 %v97
    %v354 = vunpack.c.l.b16 %v98
    %v355 = vunpack.c.l.b16 %v99
    %v356 = vunpack.c.l.b16 %v100
    %v357 = vunpack.c.l.b16 %v101
    %v358 = vunpack.c.l.b16 %v102
    %v359 = vunpack.c.l.b16 %v103
    %v360 = vunpack.c.l.b16 %v104
    %v361 = vunpack.c.l.b16 %v105
    %v362 = vunpack.c.l.b16 %v106
    %v363 = vunpack.c.l.b16 %v107
    %v364 = vunpack.c.l.b16 %v108
    %v365 = vunpack.c.l.b16 %v109
    %v366 = vunpack.c.l.b16 %v110
    %v367 = vunpack.c.l.b16 %v111
    %v368 = vpack.c.b16 %v337, %v336
    %v369 = vpack.c.b16 %v339, %v338
    %v370 = vpack.c.b16 %v341, %v340
    %v371 = vpack.c.b16 %v343, %v342
    %v372 = vpack.c.b16 %v345, %v344
    %v373 = vpack.c.b16 %v347, %v346
    %v374 = vpack.c.b16 %v349, %v348
    %v375 = vpack.c.b16 %v351, %v350
    %v376 = vpack.c.b16 %v353, %v352
    %v377 = vpack.c.b16 %v355, %v354
    %v378 = vpack.c.b16 %v357, %v356
    %v379 = vpack.c.b16 %v359, %v358
    %v380 = vpack.c.b16 %v361, %v360
    %v381 = vpack.c.b16 %v363, %v362
    %v382 = vpack.c.b16 %v365, %v364
    %v383 = vpack.c.b16 %v367, %v366
    %400 = vmatprep.subr.bf16.mxu0 0
    %401 = vmatpush1.bf16.msra.mxu0 %v375
    %402 = vmatprep.subr.bf16.mxu0 0
    %403 = vmatpush1.bf16.msra.mxu0 %v374
    %404 = vmatprep.subr.bf16.mxu0 0
    %405 = vmatpush1.bf16.msra.mxu0 %v373
    %406 = vmatprep.subr.bf16.mxu0 0
    %407 = vmatpush1.bf16.msra.mxu0 %v372
    %408 = vmatprep.subr.bf16.mxu0 0
    %409 = vmatpush1.bf16.msra.mxu0 %v371
    %410 = vmatprep.subr.bf16.mxu0 0
    %411 = vmatpush1.bf16.msra.mxu0 %v370
    %412 = vmatprep.subr.bf16.mxu0 0
    %413 = vmatpush1.bf16.msra.mxu0 %v369
    %414 = vmatprep.subr.bf16.mxu0 0
    %415 = vmatpush1.bf16.msra.mxu0 %v368
    %416 = vmatprep.subr.bf16.mxu0 0
    %417 = vmatpush2.bf16.msra.mxu0 %v383
    %418 = vmatprep.subr.bf16.mxu0 0
    %419 = vmatpush2.bf16.msra.mxu0 %v382
    %420 = vmatprep.subr.bf16.mxu0 0
    %421 = vmatpush2.bf16.msra.mxu0 %v381
    %422 = vmatprep.subr.bf16.mxu0 0
    %423 = vmatpush2.bf16.msra.mxu0 %v380
    %424 = vmatprep.subr.bf16.mxu0 0
    %425 = vmatpush2.bf16.msra.mxu0 %v379
    %426 = vmatprep.subr.bf16.mxu0 0
    %427 = vmatpush2.bf16.msra.mxu0 %v378
    %428 = vmatprep.subr.bf16.mxu0 0
    %429 = vmatpush2.bf16.msra.mxu0 %v377
    %430 = vmatprep.subr.bf16.mxu0 0
    %431 = vmatpush2.bf16.msra.mxu0 %v376
    %432 = vmatprep.mubr.bf16.mxu0 %v241
    %433 = vmatmul.mubr.bf16.gmra.mxu0 %v240
    %v434 = vpop.f32.mrf.mxu0
    %v435 = vadd.f32 0.0, %v434
    %v436 = vpop.f32.mrf.mxu0
    %v437 = vpop.f32.mrf.mxu0
    %v438 = vadd.f32 0.0, %v437
    %v439 = vpop.f32.mrf.mxu0
    %440 = vmatprep.mubr.bf16.mxu0 %v243
    %441 = vmatmul.mubr.bf16.gmra.mxu0 %v242
    %v442 = vpop.f32.mrf.mxu0
    %v443 = vadd.f32 0.0, %v442
    %v444 = vpop.f32.mrf.mxu0
    %v445 = vpop.f32.mrf.mxu0
    %v446 = vadd.f32 0.0, %v445
    %v447 = vpop.f32.mrf.mxu0
    %448 = vmatprep.mubr.bf16.mxu0 %v245
    %449 = vmatmul.mubr.bf16.gmra.mxu0 %v244
    %v450 = vpop.f32.mrf.mxu0
    %v451 = vadd.f32 0.0, %v450
    %v452 = vpop.f32.mrf.mxu0
    %v453 = vpop.f32.mrf.mxu0
    %v454 = vadd.f32 0.0, %v453
    %v455 = vpop.f32.mrf.mxu0
    %456 = vmatprep.mubr.bf16.mxu0 %v247
    %457 = vmatmul.mubr.bf16.gmra.mxu0 %v246
    %v458 = vpop.f32.mrf.mxu0
    %v459 = vadd.f32 0.0, %v458
    %v460 = vpop.f32.mrf.mxu0
    %v461 = vpop.f32.mrf.mxu0
    %v462 = vadd.f32 0.0, %v461
    %v463 = vpop.f32.mrf.mxu0
    %464 = vmatprep.mubr.bf16.mxu0 %v249
    %465 = vmatmul.mubr.bf16.gmra.mxu0 %v248
    %v466 = vpop.f32.mrf.mxu0
    %v467 = vadd.f32 0.0, %v466
    %v468 = vpop.f32.mrf.mxu0
    %v469 = vpop.f32.mrf.mxu0
    %v470 = vadd.f32 0.0, %v469
    %v471 = vpop.f32.mrf.mxu0
    %472 = vmatprep.mubr.bf16.mxu0 %v251
    %473 = vmatmul.mubr.bf16.gmra.mxu0 %v250
    %v474 = vpop.f32.mrf.mxu0
    %v475 = vadd.f32 0.0, %v474
    %v476 = vpop.f32.mrf.mxu0
    %v477 = vpop.f32.mrf.mxu0
    %v478 = vadd.f32 0.0, %v477
    %v479 = vpop.f32.mrf.mxu0
    %480 = vmatprep.mubr.bf16.mxu0 %v253
    %481 = vmatmul.mubr.bf16.gmra.mxu0 %v252
    %v482 = vpop.f32.mrf.mxu0
    %v483 = vadd.f32 0.0, %v482
    %v484 = vpop.f32.mrf.mxu0
    %v485 = vpop.f32.mrf.mxu0
    %v486 = vadd.f32 0.0, %v485
    %v487 = vpop.f32.mrf.mxu0
    %488 = vmatprep.mubr.bf16.mxu0 %v255
    %489 = vmatmul.mubr.bf16.gmra.mxu0 %v254
    %v490 = vpop.f32.mrf.mxu0
    %v491 = vadd.f32 0.0, %v490
    %v492 = vpop.f32.mrf.mxu0
    %v493 = vpop.f32.mrf.mxu0
    %v494 = vadd.f32 0.0, %v493
    %v495 = vpop.f32.mrf.mxu0
    %496 = vmatprep.mubr.bf16.mxu0 %v257
    %497 = vmatmul.mubr.bf16.gmra.mxu0 %v256
    %v498 = vpop.f32.mrf.mxu0
    %v499 = vadd.f32 0.0, %v498
    %v500 = vpop.f32.mrf.mxu0
    %v501 = vpop.f32.mrf.mxu0
    %v502 = vadd.f32 0.0, %v501
    %v503 = vpop.f32.mrf.mxu0
    %504 = vmatprep.mubr.bf16.mxu0 %v259
    %505 = vmatmul.mubr.bf16.gmra.mxu0 %v258
    %v506 = vpop.f32.mrf.mxu0
    %v507 = vadd.f32 0.0, %v506
    %v508 = vpop.f32.mrf.mxu0
    %v509 = vpop.f32.mrf.mxu0
    %v510 = vadd.f32 0.0, %v509
    %v511 = vpop.f32.mrf.mxu0
    %512 = vmatprep.mubr.bf16.mxu0 %v261
    %513 = vmatmul.mubr.bf16.gmra.mxu0 %v260
    %v514 = vpop.f32.mrf.mxu0
    %v515 = vadd.f32 0.0, %v514
    %v516 = vpop.f32.mrf.mxu0
    %v517 = vpop.f32.mrf.mxu0
    %v518 = vadd.f32 0.0, %v517
    %v519 = vpop.f32.mrf.mxu0
    %520 = vmatprep.mubr.bf16.mxu0 %v263
    %521 = vmatmul.mubr.bf16.gmra.mxu0 %v262
    %v522 = vpop.f32.mrf.mxu0
    %v523 = vadd.f32 0.0, %v522
    %v524 = vpop.f32.mrf.mxu0
    %v525 = vpop.f32.mrf.mxu0
    %v526 = vadd.f32 0.0, %v525
    %v527 = vpop.f32.mrf.mxu0
    %528 = vmatprep.mubr.bf16.mxu0 %v265
    %529 = vmatmul.mubr.bf16.gmra.mxu0 %v264
    %v530 = vpop.f32.mrf.mxu0
    %v531 = vadd.f32 0.0, %v530
    %v532 = vpop.f32.mrf.mxu0
    %v533 = vpop.f32.mrf.mxu0
    %v534 = vadd.f32 0.0, %v533
    %v535 = vpop.f32.mrf.mxu0
    %536 = vmatprep.mubr.bf16.mxu0 %v267
    %537 = vmatmul.mubr.bf16.gmra.mxu0 %v266
    %v538 = vpop.f32.mrf.mxu0
    %v539 = vadd.f32 0.0, %v538
    %v540 = vpop.f32.mrf.mxu0
    %v541 = vpop.f32.mrf.mxu0
    %v542 = vadd.f32 0.0, %v541
    %v543 = vpop.f32.mrf.mxu0
    %544 = vmatprep.mubr.bf16.mxu0 %v269
    %545 = vmatmul.mubr.bf16.gmra.mxu0 %v268
    %v546 = vpop.f32.mrf.mxu0
    %v547 = vadd.f32 0.0, %v546
    %v548 = vpop.f32.mrf.mxu0
    %v549 = vpop.f32.mrf.mxu0
    %v550 = vadd.f32 0.0, %v549
    %v551 = vpop.f32.mrf.mxu0
    %552 = vmatprep.mubr.bf16.mxu0 %v271
    %553 = vmatmul.mubr.bf16.gmra.mxu0 %v270
    %v554 = vpop.f32.mrf.mxu0
    %v555 = vadd.f32 0.0, %v554
    %v556 = vpop.f32.mrf.mxu0
    %v557 = vpop.f32.mrf.mxu0
    %v558 = vadd.f32 0.0, %v557
    %v559 = vpop.f32.mrf.mxu0
    %560 = vdwg.mxu0
    %v561 = vpack.c.bf16 %v438, %v435
    %v562 = vpack.c.bf16 %v446, %v443
    %v563 = vpack.c.bf16 %v454, %v451
    %v564 = vpack.c.bf16 %v462, %v459
    %v565 = vpack.c.bf16 %v470, %v467
    %v566 = vpack.c.bf16 %v478, %v475
    %v567 = vpack.c.bf16 %v486, %v483
    %v568 = vpack.c.bf16 %v494, %v491
    %v569 = vpack.c.bf16 %v502, %v499
    %v570 = vpack.c.bf16 %v510, %v507
    %v571 = vpack.c.bf16 %v518, %v515
    %v572 = vpack.c.bf16 %v526, %v523
    %v573 = vpack.c.bf16 %v534, %v531
    %v574 = vpack.c.bf16 %v542, %v539
    %v575 = vpack.c.bf16 %v550, %v547
    %v576 = vpack.c.bf16 %v558, %v555
    %v577 = vld [vmem:[#allocation7] sm:$0xf]
    %v578 = vld [vmem:[#allocation7 + $0x4] sm:$0xf]
    %v579 = vld [vmem:[#allocation7 + $0x8] sm:$0xf]
    %v580 = vld [vmem:[#allocation7 + $0xc] sm:$0xf]
    %v581 = vld [vmem:[#allocation7 + $0x10] sm:$0xf]
    %v582 = vld [vmem:[#allocation7 + $0x14] sm:$0xf]
    %v583 = vld [vmem:[#allocation7 + $0x18] sm:$0xf]
    %v584 = vld [vmem:[#allocation7 + $0x1c] sm:$0xf]
    %v585 = vld [vmem:[#allocation7 + $0x20] sm:$0xf]
    %v586 = vld [vmem:[#allocation7 + $0x24] sm:$0xf]
    %v587 = vld [vmem:[#allocation7 + $0x28] sm:$0xf]
    %v588 = vld [vmem:[#allocation7 + $0x2c] sm:$0xf]
    %v589 = vld [vmem:[#allocation7 + $0x30] sm:$0xf]
    %v590 = vld [vmem:[#allocation7 + $0x34] sm:$0xf]
    %v591 = vld [vmem:[#allocation7 + $0x38] sm:$0xf]
    %v592 = vld [vmem:[#allocation7 + $0x3c] sm:$0xf]
    %v593 = vld [vmem:[%s3] sm:$0x1]
    %v595 = vlaneseq
    %v596 = vshrl.u32 %v595, 7
    %v597 = vsub.s32 0, %v596
    %v598 = vrot.slane %v593, %v597
    %v616 = vunpack.c.l.b16 %v577
    %v617 = vunpack.c.l.b16 %v578
    %v618 = vunpack.c.l.b16 %v579
    %v619 = vunpack.c.l.b16 %v580
    %v620 = vunpack.c.l.b16 %v581
    %v621 = vunpack.c.l.b16 %v582
    %v622 = vunpack.c.l.b16 %v583
    %v623 = vunpack.c.l.b16 %v584
    %v624 = vunpack.c.l.b16 %v585
    %v625 = vunpack.c.l.b16 %v586
    %v626 = vunpack.c.l.b16 %v587
    %v627 = vunpack.c.l.b16 %v588
    %v628 = vunpack.c.l.b16 %v589
    %v629 = vunpack.c.l.b16 %v590
    %v630 = vunpack.c.l.b16 %v591
    %v631 = vunpack.c.l.b16 %v592
    %v632 = vpack.c.b16 %v617, %v616
    %v633 = vpack.c.b16 %v619, %v618
    %v634 = vpack.c.b16 %v621, %v620
    %v635 = vpack.c.b16 %v623, %v622
    %v636 = vpack.c.b16 %v625, %v624
    %v637 = vpack.c.b16 %v627, %v626
    %v638 = vpack.c.b16 %v629, %v628
    %v639 = vpack.c.b16 %v631, %v630
    %648 = vmatprep.subr.bf16.mxu0 0
    %649 = vmatpush1.bf16.msra.mxu0 %v639
    %650 = vmatprep.subr.bf16.mxu0 0
    %651 = vmatpush1.bf16.msra.mxu0 %v638
    %652 = vmatprep.subr.bf16.mxu0 0
    %653 = vmatpush1.bf16.msra.mxu0 %v637
    %654 = vmatprep.subr.bf16.mxu0 0
    %655 = vmatpush1.bf16.msra.mxu0 %v636
    %656 = vmatprep.subr.bf16.mxu0 0
    %657 = vmatpush1.bf16.msra.mxu0 %v635
    %658 = vmatprep.subr.bf16.mxu0 0
    %659 = vmatpush1.bf16.msra.mxu0 %v634
    %660 = vmatprep.subr.bf16.mxu0 0
    %661 = vmatpush1.bf16.msra.mxu0 %v633
    %662 = vmatprep.subr.bf16.mxu0 0
    %663 = vmatpush1.bf16.msra.mxu0 %v632
    %664 = vmatprep.subr.bf16.mxu0 0
    %665 = vmatpush2.bf16.msra.mxu0 0
    %666 = vmatprep.subr.bf16.mxu0 0
    %667 = vmatpush2.bf16.msra.mxu0 0
    %668 = vmatprep.subr.bf16.mxu0 0
    %669 = vmatpush2.bf16.msra.mxu0 0
    %670 = vmatprep.subr.bf16.mxu0 0
    %671 = vmatpush2.bf16.msra.mxu0 0
    %672 = vmatprep.subr.bf16.mxu0 0
    %673 = vmatpush2.bf16.msra.mxu0 0
    %674 = vmatprep.subr.bf16.mxu0 0
    %675 = vmatpush2.bf16.msra.mxu0 0
    %676 = vmatprep.subr.bf16.mxu0 0
    %677 = vmatpush2.bf16.msra.mxu0 0
    %678 = vmatprep.subr.bf16.mxu0 0
    %679 = vmatpush2.bf16.msra.mxu0 0
    %680 = vmatprep.mubr.bf16.mxu0 0
    %681 = vmatmul.mubr.bf16.gmra.mxu0 %v561
    %v682 = vpop.f32.mrf.mxu0
    %v683 = vadd.f32 %v598, %v682
    %v684 = vpop.f32.mrf.mxu0
    %v685 = vpop.f32.mrf.mxu0
    %v686 = vadd.f32 %v598, %v685
    %v687 = vpop.f32.mrf.mxu0
    %688 = vmatprep.mubr.bf16.mxu0 0
    %689 = vmatmul.mubr.bf16.gmra.mxu0 %v562
    %v690 = vpop.f32.mrf.mxu0
    %v691 = vadd.f32 %v598, %v690
    %v692 = vpop.f32.mrf.mxu0
    %v693 = vpop.f32.mrf.mxu0
    %v694 = vadd.f32 %v598, %v693
    %v695 = vpop.f32.mrf.mxu0
    %696 = vmatprep.mubr.bf16.mxu0 0
    %697 = vmatmul.mubr.bf16.gmra.mxu0 %v563
    %v698 = vpop.f32.mrf.mxu0
    %v699 = vadd.f32 %v598, %v698
    %v700 = vpop.f32.mrf.mxu0
    %v701 = vpop.f32.mrf.mxu0
    %v702 = vadd.f32 %v598, %v701
    %v703 = vpop.f32.mrf.mxu0
    %704 = vmatprep.mubr.bf16.mxu0 0
    %705 = vmatmul.mubr.bf16.gmra.mxu0 %v564
    %v706 = vpop.f32.mrf.mxu0
    %v707 = vadd.f32 %v598, %v706
    %v708 = vpop.f32.mrf.mxu0
    %v709 = vpop.f32.mrf.mxu0
    %v710 = vadd.f32 %v598, %v709
    %v711 = vpop.f32.mrf.mxu0
    %712 = vmatprep.mubr.bf16.mxu0 0
    %713 = vmatmul.mubr.bf16.gmra.mxu0 %v565
    %v714 = vpop.f32.mrf.mxu0
    %v715 = vadd.f32 %v598, %v714
    %v716 = vpop.f32.mrf.mxu0
    %v717 = vpop.f32.mrf.mxu0
    %v718 = vadd.f32 %v598, %v717
    %v719 = vpop.f32.mrf.mxu0
    %720 = vmatprep.mubr.bf16.mxu0 0
    %721 = vmatmul.mubr.bf16.gmra.mxu0 %v566
    %v722 = vpop.f32.mrf.mxu0
    %v723 = vadd.f32 %v598, %v722
    %v724 = vpop.f32.mrf.mxu0
    %v725 = vpop.f32.mrf.mxu0
    %v726 = vadd.f32 %v598, %v725
    %v727 = vpop.f32.mrf.mxu0
    %728 = vmatprep.mubr.bf16.mxu0 0
    %729 = vmatmul.mubr.bf16.gmra.mxu0 %v567
    %v730 = vpop.f32.mrf.mxu0
    %v731 = vadd.f32 %v598, %v730
    %v732 = vpop.f32.mrf.mxu0
    %v733 = vpop.f32.mrf.mxu0
    %v734 = vadd.f32 %v598, %v733
    %v735 = vpop.f32.mrf.mxu0
    %736 = vmatprep.mubr.bf16.mxu0 0
    %737 = vmatmul.mubr.bf16.gmra.mxu0 %v568
    %v738 = vpop.f32.mrf.mxu0
    %v739 = vadd.f32 %v598, %v738
    %v740 = vpop.f32.mrf.mxu0
    %v741 = vpop.f32.mrf.mxu0
    %v742 = vadd.f32 %v598, %v741
    %v743 = vpop.f32.mrf.mxu0
    %744 = vmatprep.mubr.bf16.mxu0 0
    %745 = vmatmul.mubr.bf16.gmra.mxu0 %v569
    %v746 = vpop.f32.mrf.mxu0
    %v747 = vadd.f32 %v598, %v746
    %v748 = vpop.f32.mrf.mxu0
    %v749 = vpop.f32.mrf.mxu0
    %v750 = vadd.f32 %v598, %v749
    %v751 = vpop.f32.mrf.mxu0
    %752 = vmatprep.mubr.bf16.mxu0 0
    %753 = vmatmul.mubr.bf16.gmra.mxu0 %v570
    %v754 = vpop.f32.mrf.mxu0
    %v755 = vadd.f32 %v598, %v754
    %v756 = vpop.f32.mrf.mxu0
    %v757 = vpop.f32.mrf.mxu0
    %v758 = vadd.f32 %v598, %v757
    %v759 = vpop.f32.mrf.mxu0
    %760 = vmatprep.mubr.bf16.mxu0 0
    %761 = vmatmul.mubr.bf16.gmra.mxu0 %v571
    %v762 = vpop.f32.mrf.mxu0
    %v763 = vadd.f32 %v598, %v762
    %v764 = vpop.f32.mrf.mxu0
    %v765 = vpop.f32.mrf.mxu0
    %v766 = vadd.f32 %v598, %v765
    %v767 = vpop.f32.mrf.mxu0
    %768 = vmatprep.mubr.bf16.mxu0 0
    %769 = vmatmul.mubr.bf16.gmra.mxu0 %v572
    %v770 = vpop.f32.mrf.mxu0
    %v771 = vadd.f32 %v598, %v770
    %v772 = vpop.f32.mrf.mxu0
    %v773 = vpop.f32.mrf.mxu0
    %v774 = vadd.f32 %v598, %v773
    %v775 = vpop.f32.mrf.mxu0
    %776 = vmatprep.mubr.bf16.mxu0 0
    %777 = vmatmul.mubr.bf16.gmra.mxu0 %v573
    %v778 = vpop.f32.mrf.mxu0
    %v779 = vadd.f32 %v598, %v778
    %v780 = vpop.f32.mrf.mxu0
    %v781 = vpop.f32.mrf.mxu0
    %v782 = vadd.f32 %v598, %v781
    %v783 = vpop.f32.mrf.mxu0
    %784 = vmatprep.mubr.bf16.mxu0 0
    %785 = vmatmul.mubr.bf16.gmra.mxu0 %v574
    %v786 = vpop.f32.mrf.mxu0
    %v787 = vadd.f32 %v598, %v786
    %v788 = vpop.f32.mrf.mxu0
    %v789 = vpop.f32.mrf.mxu0
    %v790 = vadd.f32 %v598, %v789
    %v791 = vpop.f32.mrf.mxu0
    %792 = vmatprep.mubr.bf16.mxu0 0
    %793 = vmatmul.mubr.bf16.gmra.mxu0 %v575
    %v794 = vpop.f32.mrf.mxu0
    %v795 = vadd.f32 %v598, %v794
    %v796 = vpop.f32.mrf.mxu0
    %v797 = vpop.f32.mrf.mxu0
    %v798 = vadd.f32 %v598, %v797
    %v799 = vpop.f32.mrf.mxu0
    %800 = vmatprep.mubr.bf16.mxu0 0
    %801 = vmatmul.mubr.bf16.gmra.mxu0 %v576
    %v802 = vpop.f32.mrf.mxu0
    %v803 = vadd.f32 %v598, %v802
    %v804 = vpop.f32.mrf.mxu0
    %v805 = vpop.f32.mrf.mxu0
    %v806 = vadd.f32 %v598, %v805
    %v807 = vpop.f32.mrf.mxu0
    %808 = vdwg.mxu0
    %v809 = vmax.f32 %v683, 0.0
    %v810 = vmax.f32 %v686, 0.0
    %v811 = vmax.f32 %v691, 0.0
    %v812 = vmax.f32 %v694, 0.0
    %v813 = vmax.f32 %v699, 0.0
    %v814 = vmax.f32 %v702, 0.0
    %v815 = vmax.f32 %v707, 0.0
    %v816 = vmax.f32 %v710, 0.0
    %v817 = vmax.f32 %v715, 0.0
    %v818 = vmax.f32 %v718, 0.0
    %v819 = vmax.f32 %v723, 0.0
    %v820 = vmax.f32 %v726, 0.0
    %v821 = vmax.f32 %v731, 0.0
    %v822 = vmax.f32 %v734, 0.0
    %v823 = vmax.f32 %v739, 0.0
    %v824 = vmax.f32 %v742, 0.0
    %v825 = vmax.f32 %v747, 0.0
    %v826 = vmax.f32 %v750, 0.0
    %v827 = vmax.f32 %v755, 0.0
    %v828 = vmax.f32 %v758, 0.0
    %v829 = vmax.f32 %v763, 0.0
    %v830 = vmax.f32 %v766, 0.0
    %v831 = vmax.f32 %v771, 0.0
    %v832 = vmax.f32 %v774, 0.0
    %v833 = vmax.f32 %v779, 0.0
    %v834 = vmax.f32 %v782, 0.0
    %v835 = vmax.f32 %v787, 0.0
    %v836 = vmax.f32 %v790, 0.0
    %v837 = vmax.f32 %v795, 0.0
    %v838 = vmax.f32 %v798, 0.0
    %v839 = vmax.f32 %v803, 0.0
    %v840 = vmax.f32 %v806, 0.0
    %v841 = vpack.c.bf16 %v810, %v809
    %v842 = vpack.c.bf16 %v812, %v811
    %v843 = vpack.c.bf16 %v814, %v813
    %v844 = vpack.c.bf16 %v816, %v815
    %v845 = vpack.c.bf16 %v818, %v817
    %v846 = vpack.c.bf16 %v820, %v819
    %v847 = vpack.c.bf16 %v822, %v821
    %v848 = vpack.c.bf16 %v824, %v823
    %v849 = vpack.c.bf16 %v826, %v825
    %v850 = vpack.c.bf16 %v828, %v827
    %v851 = vpack.c.bf16 %v830, %v829
    %v852 = vpack.c.bf16 %v832, %v831
    %v853 = vpack.c.bf16 %v834, %v833
    %v854 = vpack.c.bf16 %v836, %v835
    %v855 = vpack.c.bf16 %v838, %v837
    %v856 = vpack.c.bf16 %v840, %v839
    %857 = vmatprep.subr.bf16.mxu0 0
    %858 = vmatpush1.bf16.msra.mxu0 %v848
    %859 = vmatprep.subr.bf16.mxu0 0
    %860 = vmatpush1.bf16.msra.mxu0 %v847
    %861 = vmatprep.subr.bf16.mxu0 0
    %862 = vmatpush1.bf16.msra.mxu0 %v846
    %863 = vmatprep.subr.bf16.mxu0 0
    %864 = vmatpush1.bf16.msra.mxu0 %v845
    %865 = vmatprep.subr.bf16.mxu0 0
    %866 = vmatpush1.bf16.msra.mxu0 %v844
    %867 = vmatprep.subr.bf16.mxu0 0
    %868 = vmatpush1.bf16.msra.mxu0 %v843
    %869 = vmatprep.subr.bf16.mxu0 0
    %870 = vmatpush1.bf16.msra.mxu0 %v842
    %871 = vmatprep.subr.bf16.mxu0 0
    %872 = vmatpush1.bf16.msra.mxu0 %v841
    %873 = vmatprep.subr.bf16.mxu0 0
    %874 = vmatpush2.bf16.msra.mxu0 %v856
    %875 = vmatprep.subr.bf16.mxu0 0
    %876 = vmatpush2.bf16.msra.mxu0 %v855
    %877 = vmatprep.subr.bf16.mxu0 0
    %878 = vmatpush2.bf16.msra.mxu0 %v854
    %879 = vmatprep.subr.bf16.mxu0 0
    %880 = vmatpush2.bf16.msra.mxu0 %v853
    %881 = vmatprep.subr.bf16.mxu0 0
    %882 = vmatpush2.bf16.msra.mxu0 %v852
    %883 = vmatprep.subr.bf16.mxu0 0
    %884 = vmatpush2.bf16.msra.mxu0 %v851
    %885 = vmatprep.subr.bf16.mxu0 0
    %886 = vmatpush2.bf16.msra.mxu0 %v850
    %887 = vmatprep.subr.bf16.mxu0 0
    %888 = vmatpush2.bf16.msra.mxu0 %v849
    %889 = vmatprep.mubr.bf16.mxu0 %v241
    %890 = vmatmul.mubr.bf16.gmra.mxu0 %v240
    %v891 = vpop.f32.mrf.mxu0
    %v892 = vadd.f32 0.0, %v891
    %v893 = vpop.f32.mrf.mxu0
    %v894 = vpop.f32.mrf.mxu0
    %v895 = vadd.f32 0.0, %v894
    %v896 = vpop.f32.mrf.mxu0
    %897 = vmatprep.mubr.bf16.mxu0 %v243
    %898 = vmatmul.mubr.bf16.gmra.mxu0 %v242
    %v899 = vpop.f32.mrf.mxu0
    %v900 = vadd.f32 0.0, %v899
    %v901 = vpop.f32.mrf.mxu0
    %v902 = vpop.f32.mrf.mxu0
    %v903 = vadd.f32 0.0, %v902
    %v904 = vpop.f32.mrf.mxu0
    %905 = vmatprep.mubr.bf16.mxu0 %v245
    %906 = vmatmul.mubr.bf16.gmra.mxu0 %v244
    %v907 = vpop.f32.mrf.mxu0
    %v908 = vadd.f32 0.0, %v907
    %v909 = vpop.f32.mrf.mxu0
    %v910 = vpop.f32.mrf.mxu0
    %v911 = vadd.f32 0.0, %v910
    %v912 = vpop.f32.mrf.mxu0
    %913 = vmatprep.mubr.bf16.mxu0 %v247
    %914 = vmatmul.mubr.bf16.gmra.mxu0 %v246
    %v915 = vpop.f32.mrf.mxu0
    %v916 = vadd.f32 0.0, %v915
    %v917 = vpop.f32.mrf.mxu0
    %v918 = vpop.f32.mrf.mxu0
    %v919 = vadd.f32 0.0, %v918
    %v920 = vpop.f32.mrf.mxu0
    %921 = vmatprep.mubr.bf16.mxu0 %v249
    %922 = vmatmul.mubr.bf16.gmra.mxu0 %v248
    %v923 = vpop.f32.mrf.mxu0
    %v924 = vadd.f32 0.0, %v923
    %v925 = vpop.f32.mrf.mxu0
    %v926 = vpop.f32.mrf.mxu0
    %v927 = vadd.f32 0.0, %v926
    %v928 = vpop.f32.mrf.mxu0
    %929 = vmatprep.mubr.bf16.mxu0 %v251
    %930 = vmatmul.mubr.bf16.gmra.mxu0 %v250
    %v931 = vpop.f32.mrf.mxu0
    %v932 = vadd.f32 0.0, %v931
    %v933 = vpop.f32.mrf.mxu0
    %v934 = vpop.f32.mrf.mxu0
    %v935 = vadd.f32 0.0, %v934
    %v936 = vpop.f32.mrf.mxu0
    %937 = vmatprep.mubr.bf16.mxu0 %v253
    %938 = vmatmul.mubr.bf16.gmra.mxu0 %v252
    %v939 = vpop.f32.mrf.mxu0
    %v940 = vadd.f32 0.0, %v939
    %v941 = vpop.f32.mrf.mxu0
    %v942 = vpop.f32.mrf.mxu0
    %v943 = vadd.f32 0.0, %v942
    %v944 = vpop.f32.mrf.mxu0
    %945 = vmatprep.mubr.bf16.mxu0 %v255
    %946 = vmatmul.mubr.bf16.gmra.mxu0 %v254
    %v947 = vpop.f32.mrf.mxu0
    %v948 = vadd.f32 0.0, %v947
    %v949 = vpop.f32.mrf.mxu0
    %v950 = vpop.f32.mrf.mxu0
    %v951 = vadd.f32 0.0, %v950
    %v952 = vpop.f32.mrf.mxu0
    %953 = vmatprep.mubr.bf16.mxu0 %v257
    %954 = vmatmul.mubr.bf16.gmra.mxu0 %v256
    %v955 = vpop.f32.mrf.mxu0
    %v956 = vadd.f32 0.0, %v955
    %v957 = vpop.f32.mrf.mxu0
    %v958 = vpop.f32.mrf.mxu0
    %v959 = vadd.f32 0.0, %v958
    %v960 = vpop.f32.mrf.mxu0
    %961 = vmatprep.mubr.bf16.mxu0 %v259
    %962 = vmatmul.mubr.bf16.gmra.mxu0 %v258
    %v963 = vpop.f32.mrf.mxu0
    %v964 = vadd.f32 0.0, %v963
    %v965 = vpop.f32.mrf.mxu0
    %v966 = vpop.f32.mrf.mxu0
    %v967 = vadd.f32 0.0, %v966
    %v968 = vpop.f32.mrf.mxu0
    %969 = vmatprep.mubr.bf16.mxu0 %v261
    %970 = vmatmul.mubr.bf16.gmra.mxu0 %v260
    %v971 = vpop.f32.mrf.mxu0
    %v972 = vadd.f32 0.0, %v971
    %v973 = vpop.f32.mrf.mxu0
    %v974 = vpop.f32.mrf.mxu0
    %v975 = vadd.f32 0.0, %v974
    %v976 = vpop.f32.mrf.mxu0
    %977 = vmatprep.mubr.bf16.mxu0 %v263
    %978 = vmatmul.mubr.bf16.gmra.mxu0 %v262
    %v979 = vpop.f32.mrf.mxu0
    %v980 = vadd.f32 0.0, %v979
    %v981 = vpop.f32.mrf.mxu0
    %v982 = vpop.f32.mrf.mxu0
    %v983 = vadd.f32 0.0, %v982
    %v984 = vpop.f32.mrf.mxu0
    %985 = vmatprep.mubr.bf16.mxu0 %v265
    %986 = vmatmul.mubr.bf16.gmra.mxu0 %v264
    %v987 = vpop.f32.mrf.mxu0
    %v988 = vadd.f32 0.0, %v987
    %v989 = vpop.f32.mrf.mxu0
    %v990 = vpop.f32.mrf.mxu0
    %v991 = vadd.f32 0.0, %v990
    %v992 = vpop.f32.mrf.mxu0
    %993 = vmatprep.mubr.bf16.mxu0 %v267
    %994 = vmatmul.mubr.bf16.gmra.mxu0 %v266
    %v995 = vpop.f32.mrf.mxu0
    %v996 = vadd.f32 0.0, %v995
    %v997 = vpop.f32.mrf.mxu0
    %v998 = vpop.f32.mrf.mxu0
    %v999 = vadd.f32 0.0, %v998
    %v1000 = vpop.f32.mrf.mxu0
    %1001 = vmatprep.mubr.bf16.mxu0 %v269
    %1002 = vmatmul.mubr.bf16.gmra.mxu0 %v268
    %v1003 = vpop.f32.mrf.mxu0
    %v1004 = vadd.f32 0.0, %v1003
    %v1005 = vpop.f32.mrf.mxu0
    %v1006 = vpop.f32.mrf.mxu0
    %v1007 = vadd.f32 0.0, %v1006
    %v1008 = vpop.f32.mrf.mxu0
    %1009 = vmatprep.mubr.bf16.mxu0 %v271
    %1010 = vmatmul.mubr.bf16.gmra.mxu0 %v270
    %v1011 = vpop.f32.mrf.mxu0
    %v1012 = vadd.f32 0.0, %v1011
    %v1013 = vpop.f32.mrf.mxu0
    %v1014 = vpop.f32.mrf.mxu0
    %v1015 = vadd.f32 0.0, %v1014
    %v1016 = vpop.f32.mrf.mxu0
    %1017 = vdwg.mxu0
    %v1018 = vpack.c.bf16 %v895, %v892
    %v1019 = vpack.c.bf16 %v903, %v900
    %v1020 = vpack.c.bf16 %v911, %v908
    %v1021 = vpack.c.bf16 %v919, %v916
    %v1022 = vpack.c.bf16 %v927, %v924
    %v1023 = vpack.c.bf16 %v935, %v932
    %v1024 = vpack.c.bf16 %v943, %v940
    %v1025 = vpack.c.bf16 %v951, %v948
    %v1026 = vpack.c.bf16 %v959, %v956
    %v1027 = vpack.c.bf16 %v967, %v964
    %v1028 = vpack.c.bf16 %v975, %v972
    %v1029 = vpack.c.bf16 %v983, %v980
    %v1030 = vpack.c.bf16 %v991, %v988
    %v1031 = vpack.c.bf16 %v999, %v996
    %v1032 = vpack.c.bf16 %v1007, %v1004
    %v1033 = vpack.c.bf16 %v1015, %v1012
    %v1034 = vld [vmem:[#allocation8] sm:$0xf]
    %v1035 = vld [vmem:[#allocation8 + $0x4] sm:$0xf]
    %v1036 = vld [vmem:[#allocation8 + $0x8] sm:$0xf]
    %v1037 = vld [vmem:[#allocation8 + $0xc] sm:$0xf]
    %v1038 = vld [vmem:[#allocation8 + $0x10] sm:$0xf]
    %v1039 = vld [vmem:[#allocation8 + $0x14] sm:$0xf]
    %v1040 = vld [vmem:[#allocation8 + $0x18] sm:$0xf]
    %v1041 = vld [vmem:[#allocation8 + $0x1c] sm:$0xf]
    %v1042 = vld [vmem:[#allocation8 + $0x20] sm:$0xf]
    %v1043 = vld [vmem:[#allocation8 + $0x24] sm:$0xf]
    %v1044 = vld [vmem:[#allocation8 + $0x28] sm:$0xf]
    %v1045 = vld [vmem:[#allocation8 + $0x2c] sm:$0xf]
    %v1046 = vld [vmem:[#allocation8 + $0x30] sm:$0xf]
    %v1047 = vld [vmem:[#allocation8 + $0x34] sm:$0xf]
    %v1048 = vld [vmem:[#allocation8 + $0x38] sm:$0xf]
    %v1049 = vld [vmem:[#allocation8 + $0x3c] sm:$0xf]
    %v1050 = vld [vmem:[%s5] sm:$0x1]
    %v1052 = vlaneseq
    %v1053 = vshrl.u32 %v1052, 7
    %v1054 = vsub.s32 0, %v1053
    %v1055 = vrot.slane %v1050, %v1054
    %v1073 = vunpack.c.l.b16 %v1034
    %v1074 = vunpack.c.l.b16 %v1035
    %v1075 = vunpack.c.l.b16 %v1036
    %v1076 = vunpack.c.l.b16 %v1037
    %v1077 = vunpack.c.l.b16 %v1038
    %v1078 = vunpack.c.l.b16 %v1039
    %v1079 = vunpack.c.l.b16 %v1040
    %v1080 = vunpack.c.l.b16 %v1041
    %v1081 = vunpack.c.l.b16 %v1042
    %v1082 = vunpack.c.l.b16 %v1043
    %v1083 = vunpack.c.l.b16 %v1044
    %v1084 = vunpack.c.l.b16 %v1045
    %v1085 = vunpack.c.l.b16 %v1046
    %v1086 = vunpack.c.l.b16 %v1047
    %v1087 = vunpack.c.l.b16 %v1048
    %v1088 = vunpack.c.l.b16 %v1049
    %v1089 = vpack.c.b16 %v1074, %v1073
    %v1090 = vpack.c.b16 %v1076, %v1075
    %v1091 = vpack.c.b16 %v1078, %v1077
    %v1092 = vpack.c.b16 %v1080, %v1079
    %v1093 = vpack.c.b16 %v1082, %v1081
    %v1094 = vpack.c.b16 %v1084, %v1083
    %v1095 = vpack.c.b16 %v1086, %v1085
    %v1096 = vpack.c.b16 %v1088, %v1087
    %1105 = vmatprep.subr.bf16.mxu0 0
    %1106 = vmatpush1.bf16.msra.mxu0 %v1096
    %1107 = vmatprep.subr.bf16.mxu0 0
    %1108 = vmatpush1.bf16.msra.mxu0 %v1095
    %1109 = vmatprep.subr.bf16.mxu0 0
    %1110 = vmatpush1.bf16.msra.mxu0 %v1094
    %1111 = vmatprep.subr.bf16.mxu0 0
    %1112 = vmatpush1.bf16.msra.mxu0 %v1093
    %1113 = vmatprep.subr.bf16.mxu0 0
    %1114 = vmatpush1.bf16.msra.mxu0 %v1092
    %1115 = vmatprep.subr.bf16.mxu0 0
    %1116 = vmatpush1.bf16.msra.mxu0 %v1091
    %1117 = vmatprep.subr.bf16.mxu0 0
    %1118 = vmatpush1.bf16.msra.mxu0 %v1090
    %1119 = vmatprep.subr.bf16.mxu0 0
    %1120 = vmatpush1.bf16.msra.mxu0 %v1089
    %1121 = vmatprep.subr.bf16.mxu0 0
    %1122 = vmatpush2.bf16.msra.mxu0 0
    %1123 = vmatprep.subr.bf16.mxu0 0
    %1124 = vmatpush2.bf16.msra.mxu0 0
    %1125 = vmatprep.subr.bf16.mxu0 0
    %1126 = vmatpush2.bf16.msra.mxu0 0
    %1127 = vmatprep.subr.bf16.mxu0 0
    %1128 = vmatpush2.bf16.msra.mxu0 0
    %1129 = vmatprep.subr.bf16.mxu0 0
    %1130 = vmatpush2.bf16.msra.mxu0 0
    %1131 = vmatprep.subr.bf16.mxu0 0
    %1132 = vmatpush2.bf16.msra.mxu0 0
    %1133 = vmatprep.subr.bf16.mxu0 0
    %1134 = vmatpush2.bf16.msra.mxu0 0
    %1135 = vmatprep.subr.bf16.mxu0 0
    %1136 = vmatpush2.bf16.msra.mxu0 0
    %1137 = vmatprep.mubr.bf16.mxu0 0
    %1138 = vmatmul.mubr.bf16.gmra.mxu0 %v1018
    %v1139 = vpop.f32.mrf.mxu0
    %v1140 = vadd.f32 %v1055, %v1139
    %v1141 = vpop.f32.mrf.mxu0
    %v1142 = vpop.f32.mrf.mxu0
    %v1143 = vadd.f32 %v1055, %v1142
    %v1144 = vpop.f32.mrf.mxu0
    %1145 = vmatprep.mubr.bf16.mxu0 0
    %1146 = vmatmul.mubr.bf16.gmra.mxu0 %v1019
    %v1147 = vpop.f32.mrf.mxu0
    %v1148 = vadd.f32 %v1055, %v1147
    %v1149 = vpop.f32.mrf.mxu0
    %v1150 = vpop.f32.mrf.mxu0
    %v1151 = vadd.f32 %v1055, %v1150
    %v1152 = vpop.f32.mrf.mxu0
    %1153 = vmatprep.mubr.bf16.mxu0 0
    %1154 = vmatmul.mubr.bf16.gmra.mxu0 %v1020
    %v1155 = vpop.f32.mrf.mxu0
    %v1156 = vadd.f32 %v1055, %v1155
    %v1157 = vpop.f32.mrf.mxu0
    %v1158 = vpop.f32.mrf.mxu0
    %v1159 = vadd.f32 %v1055, %v1158
    %v1160 = vpop.f32.mrf.mxu0
    %1161 = vmatprep.mubr.bf16.mxu0 0
    %1162 = vmatmul.mubr.bf16.gmra.mxu0 %v1021
    %v1163 = vpop.f32.mrf.mxu0
    %v1164 = vadd.f32 %v1055, %v1163
    %v1165 = vpop.f32.mrf.mxu0
    %v1166 = vpop.f32.mrf.mxu0
    %v1167 = vadd.f32 %v1055, %v1166
    %v1168 = vpop.f32.mrf.mxu0
    %1169 = vmatprep.mubr.bf16.mxu0 0
    %1170 = vmatmul.mubr.bf16.gmra.mxu0 %v1022
    %v1171 = vpop.f32.mrf.mxu0
    %v1172 = vadd.f32 %v1055, %v1171
    %v1173 = vpop.f32.mrf.mxu0
    %v1174 = vpop.f32.mrf.mxu0
    %v1175 = vadd.f32 %v1055, %v1174
    %v1176 = vpop.f32.mrf.mxu0
    %1177 = vmatprep.mubr.bf16.mxu0 0
    %1178 = vmatmul.mubr.bf16.gmra.mxu0 %v1023
    %v1179 = vpop.f32.mrf.mxu0
    %v1180 = vadd.f32 %v1055, %v1179
    %v1181 = vpop.f32.mrf.mxu0
    %v1182 = vpop.f32.mrf.mxu0
    %v1183 = vadd.f32 %v1055, %v1182
    %v1184 = vpop.f32.mrf.mxu0
    %1185 = vmatprep.mubr.bf16.mxu0 0
    %1186 = vmatmul.mubr.bf16.gmra.mxu0 %v1024
    %v1187 = vpop.f32.mrf.mxu0
    %v1188 = vadd.f32 %v1055, %v1187
    %v1189 = vpop.f32.mrf.mxu0
    %v1190 = vpop.f32.mrf.mxu0
    %v1191 = vadd.f32 %v1055, %v1190
    %v1192 = vpop.f32.mrf.mxu0
    %1193 = vmatprep.mubr.bf16.mxu0 0
    %1194 = vmatmul.mubr.bf16.gmra.mxu0 %v1025
    %v1195 = vpop.f32.mrf.mxu0
    %v1196 = vadd.f32 %v1055, %v1195
    %v1197 = vpop.f32.mrf.mxu0
    %v1198 = vpop.f32.mrf.mxu0
    %v1199 = vadd.f32 %v1055, %v1198
    %v1200 = vpop.f32.mrf.mxu0
    %1201 = vmatprep.mubr.bf16.mxu0 0
    %1202 = vmatmul.mubr.bf16.gmra.mxu0 %v1026
    %v1203 = vpop.f32.mrf.mxu0
    %v1204 = vadd.f32 %v1055, %v1203
    %v1205 = vpop.f32.mrf.mxu0
    %v1206 = vpop.f32.mrf.mxu0
    %v1207 = vadd.f32 %v1055, %v1206
    %v1208 = vpop.f32.mrf.mxu0
    %1209 = vmatprep.mubr.bf16.mxu0 0
    %1210 = vmatmul.mubr.bf16.gmra.mxu0 %v1027
    %v1211 = vpop.f32.mrf.mxu0
    %v1212 = vadd.f32 %v1055, %v1211
    %v1213 = vpop.f32.mrf.mxu0
    %v1214 = vpop.f32.mrf.mxu0
    %v1215 = vadd.f32 %v1055, %v1214
    %v1216 = vpop.f32.mrf.mxu0
    %1217 = vmatprep.mubr.bf16.mxu0 0
    %1218 = vmatmul.mubr.bf16.gmra.mxu0 %v1028
    %v1219 = vpop.f32.mrf.mxu0
    %v1220 = vadd.f32 %v1055, %v1219
    %v1221 = vpop.f32.mrf.mxu0
    %v1222 = vpop.f32.mrf.mxu0
    %v1223 = vadd.f32 %v1055, %v1222
    %v1224 = vpop.f32.mrf.mxu0
    %1225 = vmatprep.mubr.bf16.mxu0 0
    %1226 = vmatmul.mubr.bf16.gmra.mxu0 %v1029
    %v1227 = vpop.f32.mrf.mxu0
    %v1228 = vadd.f32 %v1055, %v1227
    %v1229 = vpop.f32.mrf.mxu0
    %v1230 = vpop.f32.mrf.mxu0
    %v1231 = vadd.f32 %v1055, %v1230
    %v1232 = vpop.f32.mrf.mxu0
    %1233 = vmatprep.mubr.bf16.mxu0 0
    %1234 = vmatmul.mubr.bf16.gmra.mxu0 %v1030
    %v1235 = vpop.f32.mrf.mxu0
    %v1236 = vadd.f32 %v1055, %v1235
    %v1237 = vpop.f32.mrf.mxu0
    %v1238 = vpop.f32.mrf.mxu0
    %v1239 = vadd.f32 %v1055, %v1238
    %v1240 = vpop.f32.mrf.mxu0
    %1241 = vmatprep.mubr.bf16.mxu0 0
    %1242 = vmatmul.mubr.bf16.gmra.mxu0 %v1031
    %v1243 = vpop.f32.mrf.mxu0
    %v1244 = vadd.f32 %v1055, %v1243
    %v1245 = vpop.f32.mrf.mxu0
    %v1246 = vpop.f32.mrf.mxu0
    %v1247 = vadd.f32 %v1055, %v1246
    %v1248 = vpop.f32.mrf.mxu0
    %1249 = vmatprep.mubr.bf16.mxu0 0
    %1250 = vmatmul.mubr.bf16.gmra.mxu0 %v1032
    %v1251 = vpop.f32.mrf.mxu0
    %v1252 = vadd.f32 %v1055, %v1251
    %v1253 = vpop.f32.mrf.mxu0
    %v1254 = vpop.f32.mrf.mxu0
    %v1255 = vadd.f32 %v1055, %v1254
    %v1256 = vpop.f32.mrf.mxu0
    %1257 = vmatprep.mubr.bf16.mxu0 0
    %1258 = vmatmul.mubr.bf16.gmra.mxu0 %v1033
    %v1259 = vpop.f32.mrf.mxu0
    %v1260 = vadd.f32 %v1055, %v1259
    %v1261 = vpop.f32.mrf.mxu0
    %v1262 = vpop.f32.mrf.mxu0
    %v1263 = vadd.f32 %v1055, %v1262
    %v1264 = vpop.f32.mrf.mxu0
    %1265 = vdwg.mxu0
    %v1266 = vmax.f32 %v1140, 0.0
    %v1267 = vmax.f32 %v1143, 0.0
    %v1268 = vmax.f32 %v1148, 0.0
    %v1269 = vmax.f32 %v1151, 0.0
    %v1270 = vmax.f32 %v1156, 0.0
    %v1271 = vmax.f32 %v1159, 0.0
    %v1272 = vmax.f32 %v1164, 0.0
    %v1273 = vmax.f32 %v1167, 0.0
    %v1274 = vmax.f32 %v1172, 0.0
    %v1275 = vmax.f32 %v1175, 0.0
    %v1276 = vmax.f32 %v1180, 0.0
    %v1277 = vmax.f32 %v1183, 0.0
    %v1278 = vmax.f32 %v1188, 0.0
    %v1279 = vmax.f32 %v1191, 0.0
    %v1280 = vmax.f32 %v1196, 0.0
    %v1281 = vmax.f32 %v1199, 0.0
    %v1282 = vmax.f32 %v1204, 0.0
    %v1283 = vmax.f32 %v1207, 0.0
    %v1284 = vmax.f32 %v1212, 0.0
    %v1285 = vmax.f32 %v1215, 0.0
    %v1286 = vmax.f32 %v1220, 0.0
    %v1287 = vmax.f32 %v1223, 0.0
    %v1288 = vmax.f32 %v1228, 0.0
    %v1289 = vmax.f32 %v1231, 0.0
    %v1290 = vmax.f32 %v1236, 0.0
    %v1291 = vmax.f32 %v1239, 0.0
    %v1292 = vmax.f32 %v1244, 0.0
    %v1293 = vmax.f32 %v1247, 0.0
    %v1294 = vmax.f32 %v1252, 0.0
    %v1295 = vmax.f32 %v1255, 0.0
    %v1296 = vmax.f32 %v1260, 0.0
    %v1297 = vmax.f32 %v1263, 0.0
    %v1298 = vpack.c.bf16 %v1267, %v1266
    %v1299 = vpack.c.bf16 %v1269, %v1268
    %v1300 = vpack.c.bf16 %v1271, %v1270
    %v1301 = vpack.c.bf16 %v1273, %v1272
    %v1302 = vpack.c.bf16 %v1275, %v1274
    %v1303 = vpack.c.bf16 %v1277, %v1276
    %v1304 = vpack.c.bf16 %v1279, %v1278
    %v1305 = vpack.c.bf16 %v1281, %v1280
    %v1306 = vpack.c.bf16 %v1283, %v1282
    %v1307 = vpack.c.bf16 %v1285, %v1284
    %v1308 = vpack.c.bf16 %v1287, %v1286
    %v1309 = vpack.c.bf16 %v1289, %v1288
    %v1310 = vpack.c.bf16 %v1291, %v1290
    %v1311 = vpack.c.bf16 %v1293, %v1292
    %v1312 = vpack.c.bf16 %v1295, %v1294
    %v1313 = vpack.c.bf16 %v1297, %v1296
    %1314 = vmatprep.subr.bf16.mxu0 0
    %1315 = vmatpush1.bf16.msra.mxu0 %v1305
    %1316 = vmatprep.subr.bf16.mxu0 0
    %1317 = vmatpush1.bf16.msra.mxu0 %v1304
    %1318 = vmatprep.subr.bf16.mxu0 0
    %1319 = vmatpush1.bf16.msra.mxu0 %v1303
    %1320 = vmatprep.subr.bf16.mxu0 0
    %1321 = vmatpush1.bf16.msra.mxu0 %v1302
    %1322 = vmatprep.subr.bf16.mxu0 0
    %1323 = vmatpush1.bf16.msra.mxu0 %v1301
    %1324 = vmatprep.subr.bf16.mxu0 0
    %1325 = vmatpush1.bf16.msra.mxu0 %v1300
    %1326 = vmatprep.subr.bf16.mxu0 0
    %1327 = vmatpush1.bf16.msra.mxu0 %v1299
    %1328 = vmatprep.subr.bf16.mxu0 0
    %1329 = vmatpush1.bf16.msra.mxu0 %v1298
    %1330 = vmatprep.subr.bf16.mxu0 0
    %1331 = vmatpush2.bf16.msra.mxu0 %v1313
    %1332 = vmatprep.subr.bf16.mxu0 0
    %1333 = vmatpush2.bf16.msra.mxu0 %v1312
    %1334 = vmatprep.subr.bf16.mxu0 0
    %1335 = vmatpush2.bf16.msra.mxu0 %v1311
    %1336 = vmatprep.subr.bf16.mxu0 0
    %1337 = vmatpush2.bf16.msra.mxu0 %v1310
    %1338 = vmatprep.subr.bf16.mxu0 0
    %1339 = vmatpush2.bf16.msra.mxu0 %v1309
    %1340 = vmatprep.subr.bf16.mxu0 0
    %1341 = vmatpush2.bf16.msra.mxu0 %v1308
    %1342 = vmatprep.subr.bf16.mxu0 0
    %1343 = vmatpush2.bf16.msra.mxu0 %v1307
    %1344 = vmatprep.subr.bf16.mxu0 0
    %1345 = vmatpush2.bf16.msra.mxu0 %v1306
    %1346 = vmatprep.mubr.bf16.mxu0 %v241
    %1347 = vmatmul.mubr.bf16.gmra.mxu0 %v240
    %v1348 = vpop.f32.mrf.mxu0
    %v1349 = vadd.f32 0.0, %v1348
    %v1350 = vpop.f32.mrf.mxu0
    %v1351 = vpop.f32.mrf.mxu0
    %v1352 = vadd.f32 0.0, %v1351
    %v1353 = vpop.f32.mrf.mxu0
    %1354 = vmatprep.mubr.bf16.mxu0 %v243
    %1355 = vmatmul.mubr.bf16.gmra.mxu0 %v242
    %v1356 = vpop.f32.mrf.mxu0
    %v1357 = vadd.f32 0.0, %v1356
    %v1358 = vpop.f32.mrf.mxu0
    %v1359 = vpop.f32.mrf.mxu0
    %v1360 = vadd.f32 0.0, %v1359
    %v1361 = vpop.f32.mrf.mxu0
    %1362 = vmatprep.mubr.bf16.mxu0 %v245
    %1363 = vmatmul.mubr.bf16.gmra.mxu0 %v244
    %v1364 = vpop.f32.mrf.mxu0
    %v1365 = vadd.f32 0.0, %v1364
    %v1366 = vpop.f32.mrf.mxu0
    %v1367 = vpop.f32.mrf.mxu0
    %v1368 = vadd.f32 0.0, %v1367
    %v1369 = vpop.f32.mrf.mxu0
    %1370 = vmatprep.mubr.bf16.mxu0 %v247
    %1371 = vmatmul.mubr.bf16.gmra.mxu0 %v246
    %v1372 = vpop.f32.mrf.mxu0
    %v1373 = vadd.f32 0.0, %v1372
    %v1374 = vpop.f32.mrf.mxu0
    %v1375 = vpop.f32.mrf.mxu0
    %v1376 = vadd.f32 0.0, %v1375
    %v1377 = vpop.f32.mrf.mxu0
    %1378 = vmatprep.mubr.bf16.mxu0 %v249
    %1379 = vmatmul.mubr.bf16.gmra.mxu0 %v248
    %v1380 = vpop.f32.mrf.mxu0
    %v1381 = vadd.f32 0.0, %v1380
    %v1382 = vpop.f32.mrf.mxu0
    %v1383 = vpop.f32.mrf.mxu0
    %v1384 = vadd.f32 0.0, %v1383
    %v1385 = vpop.f32.mrf.mxu0
    %1386 = vmatprep.mubr.bf16.mxu0 %v251
    %1387 = vmatmul.mubr.bf16.gmra.mxu0 %v250
    %v1388 = vpop.f32.mrf.mxu0
    %v1389 = vadd.f32 0.0, %v1388
    %v1390 = vpop.f32.mrf.mxu0
    %v1391 = vpop.f32.mrf.mxu0
    %v1392 = vadd.f32 0.0, %v1391
    %v1393 = vpop.f32.mrf.mxu0
    %1394 = vmatprep.mubr.bf16.mxu0 %v253
    %1395 = vmatmul.mubr.bf16.gmra.mxu0 %v252
    %v1396 = vpop.f32.mrf.mxu0
    %v1397 = vadd.f32 0.0, %v1396
    %v1398 = vpop.f32.mrf.mxu0
    %v1399 = vpop.f32.mrf.mxu0
    %v1400 = vadd.f32 0.0, %v1399
    %v1401 = vpop.f32.mrf.mxu0
    %1402 = vmatprep.mubr.bf16.mxu0 %v255
    %1403 = vmatmul.mubr.bf16.gmra.mxu0 %v254
    %v1404 = vpop.f32.mrf.mxu0
    %v1405 = vadd.f32 0.0, %v1404
    %v1406 = vpop.f32.mrf.mxu0
    %v1407 = vpop.f32.mrf.mxu0
    %v1408 = vadd.f32 0.0, %v1407
    %v1409 = vpop.f32.mrf.mxu0
    %1410 = vmatprep.mubr.bf16.mxu0 %v257
    %1411 = vmatmul.mubr.bf16.gmra.mxu0 %v256
    %v1412 = vpop.f32.mrf.mxu0
    %v1413 = vadd.f32 0.0, %v1412
    %v1414 = vpop.f32.mrf.mxu0
    %v1415 = vpop.f32.mrf.mxu0
    %v1416 = vadd.f32 0.0, %v1415
    %v1417 = vpop.f32.mrf.mxu0
    %1418 = vmatprep.mubr.bf16.mxu0 %v259
    %1419 = vmatmul.mubr.bf16.gmra.mxu0 %v258
    %v1420 = vpop.f32.mrf.mxu0
    %v1421 = vadd.f32 0.0, %v1420
    %v1422 = vpop.f32.mrf.mxu0
    %v1423 = vpop.f32.mrf.mxu0
    %v1424 = vadd.f32 0.0, %v1423
    %v1425 = vpop.f32.mrf.mxu0
    %1426 = vmatprep.mubr.bf16.mxu0 %v261
    %1427 = vmatmul.mubr.bf16.gmra.mxu0 %v260
    %v1428 = vpop.f32.mrf.mxu0
    %v1429 = vadd.f32 0.0, %v1428
    %v1430 = vpop.f32.mrf.mxu0
    %v1431 = vpop.f32.mrf.mxu0
    %v1432 = vadd.f32 0.0, %v1431
    %v1433 = vpop.f32.mrf.mxu0
    %1434 = vmatprep.mubr.bf16.mxu0 %v263
    %1435 = vmatmul.mubr.bf16.gmra.mxu0 %v262
    %v1436 = vpop.f32.mrf.mxu0
    %v1437 = vadd.f32 0.0, %v1436
    %v1438 = vpop.f32.mrf.mxu0
    %v1439 = vpop.f32.mrf.mxu0
    %v1440 = vadd.f32 0.0, %v1439
    %v1441 = vpop.f32.mrf.mxu0
    %1442 = vmatprep.mubr.bf16.mxu0 %v265
    %1443 = vmatmul.mubr.bf16.gmra.mxu0 %v264
    %v1444 = vpop.f32.mrf.mxu0
    %v1445 = vadd.f32 0.0, %v1444
    %v1446 = vpop.f32.mrf.mxu0
    %v1447 = vpop.f32.mrf.mxu0
    %v1448 = vadd.f32 0.0, %v1447
    %v1449 = vpop.f32.mrf.mxu0
    %1450 = vmatprep.mubr.bf16.mxu0 %v267
    %1451 = vmatmul.mubr.bf16.gmra.mxu0 %v266
    %v1452 = vpop.f32.mrf.mxu0
    %v1453 = vadd.f32 0.0, %v1452
    %v1454 = vpop.f32.mrf.mxu0
    %v1455 = vpop.f32.mrf.mxu0
    %v1456 = vadd.f32 0.0, %v1455
    %v1457 = vpop.f32.mrf.mxu0
    %1458 = vmatprep.mubr.bf16.mxu0 %v269
    %1459 = vmatmul.mubr.bf16.gmra.mxu0 %v268
    %v1460 = vpop.f32.mrf.mxu0
    %v1461 = vadd.f32 0.0, %v1460
    %v1462 = vpop.f32.mrf.mxu0
    %v1463 = vpop.f32.mrf.mxu0
    %v1464 = vadd.f32 0.0, %v1463
    %v1465 = vpop.f32.mrf.mxu0
    %1466 = vmatprep.mubr.bf16.mxu0 %v271
    %1467 = vmatmul.mubr.bf16.gmra.mxu0 %v270
    %v1468 = vpop.f32.mrf.mxu0
    %v1469 = vadd.f32 0.0, %v1468
    %v1470 = vpop.f32.mrf.mxu0
    %v1471 = vpop.f32.mrf.mxu0
    %v1472 = vadd.f32 0.0, %v1471
    %v1473 = vpop.f32.mrf.mxu0
    %1474 = vdwg.mxu0
    %v1475 = vpack.c.bf16 %v1352, %v1349
    %v1476 = vpack.c.bf16 %v1360, %v1357
    %v1477 = vpack.c.bf16 %v1368, %v1365
    %v1478 = vpack.c.bf16 %v1376, %v1373
    %v1479 = vpack.c.bf16 %v1384, %v1381
    %v1480 = vpack.c.bf16 %v1392, %v1389
    %v1481 = vpack.c.bf16 %v1400, %v1397
    %v1482 = vpack.c.bf16 %v1408, %v1405
    %v1483 = vpack.c.bf16 %v1416, %v1413
    %v1484 = vpack.c.bf16 %v1424, %v1421
    %v1485 = vpack.c.bf16 %v1432, %v1429
    %v1486 = vpack.c.bf16 %v1440, %v1437
    %v1487 = vpack.c.bf16 %v1448, %v1445
    %v1488 = vpack.c.bf16 %v1456, %v1453
    %v1489 = vpack.c.bf16 %v1464, %v1461
    %v1490 = vpack.c.bf16 %v1472, %v1469
    %1491 = vmatprep.subr.bf16.mxu0 0
    %1492 = vmatpush1.bf16.msra.mxu0 %v1096
    %1493 = vmatprep.subr.bf16.mxu0 0
    %1494 = vmatpush1.bf16.msra.mxu0 %v1095
    %1495 = vmatprep.subr.bf16.mxu0 0
    %1496 = vmatpush1.bf16.msra.mxu0 %v1094
    %1497 = vmatprep.subr.bf16.mxu0 0
    %1498 = vmatpush1.bf16.msra.mxu0 %v1093
    %1499 = vmatprep.subr.bf16.mxu0 0
    %1500 = vmatpush1.bf16.msra.mxu0 %v1092
    %1501 = vmatprep.subr.bf16.mxu0 0
    %1502 = vmatpush1.bf16.msra.mxu0 %v1091
    %1503 = vmatprep.subr.bf16.mxu0 0
    %1504 = vmatpush1.bf16.msra.mxu0 %v1090
    %1505 = vmatprep.subr.bf16.mxu0 0
    %1506 = vmatpush1.bf16.msra.mxu0 %v1089
    %1507 = vmatprep.subr.bf16.mxu0 0
    %1508 = vmatpush2.bf16.msra.mxu0 0
    %1509 = vmatprep.subr.bf16.mxu0 0
    %1510 = vmatpush2.bf16.msra.mxu0 0
    %1511 = vmatprep.subr.bf16.mxu0 0
    %1512 = vmatpush2.bf16.msra.mxu0 0
    %1513 = vmatprep.subr.bf16.mxu0 0
    %1514 = vmatpush2.bf16.msra.mxu0 0
    %1515 = vmatprep.subr.bf16.mxu0 0
    %1516 = vmatpush2.bf16.msra.mxu0 0
    %1517 = vmatprep.subr.bf16.mxu0 0
    %1518 = vmatpush2.bf16.msra.mxu0 0
    %1519 = vmatprep.subr.bf16.mxu0 0
    %1520 = vmatpush2.bf16.msra.mxu0 0
    %1521 = vmatprep.subr.bf16.mxu0 0
    %1522 = vmatpush2.bf16.msra.mxu0 0
    %1523 = vmatprep.mubr.bf16.mxu0 0
    %1524 = vmatmul.mubr.bf16.gmra.mxu0 %v1475
    %v1525 = vpop.f32.mrf.mxu0
    %v1526 = vadd.f32 %v1055, %v1525
    %v1527 = vpop.f32.mrf.mxu0
    %v1528 = vpop.f32.mrf.mxu0
    %v1529 = vadd.f32 %v1055, %v1528
    %v1530 = vpop.f32.mrf.mxu0
    %1531 = vmatprep.mubr.bf16.mxu0 0
    %1532 = vmatmul.mubr.bf16.gmra.mxu0 %v1476
    %v1533 = vpop.f32.mrf.mxu0
    %v1534 = vadd.f32 %v1055, %v1533
    %v1535 = vpop.f32.mrf.mxu0
    %v1536 = vpop.f32.mrf.mxu0
    %v1537 = vadd.f32 %v1055, %v1536
    %v1538 = vpop.f32.mrf.mxu0
    %1539 = vmatprep.mubr.bf16.mxu0 0
    %1540 = vmatmul.mubr.bf16.gmra.mxu0 %v1477
    %v1541 = vpop.f32.mrf.mxu0
    %v1542 = vadd.f32 %v1055, %v1541
    %v1543 = vpop.f32.mrf.mxu0
    %v1544 = vpop.f32.mrf.mxu0
    %v1545 = vadd.f32 %v1055, %v1544
    %v1546 = vpop.f32.mrf.mxu0
    %1547 = vmatprep.mubr.bf16.mxu0 0
    %1548 = vmatmul.mubr.bf16.gmra.mxu0 %v1478
    %v1549 = vpop.f32.mrf.mxu0
    %v1550 = vadd.f32 %v1055, %v1549
    %v1551 = vpop.f32.mrf.mxu0
    %v1552 = vpop.f32.mrf.mxu0
    %v1553 = vadd.f32 %v1055, %v1552
    %v1554 = vpop.f32.mrf.mxu0
    %1555 = vmatprep.mubr.bf16.mxu0 0
    %1556 = vmatmul.mubr.bf16.gmra.mxu0 %v1479
    %v1557 = vpop.f32.mrf.mxu0
    %v1558 = vadd.f32 %v1055, %v1557
    %v1559 = vpop.f32.mrf.mxu0
    %v1560 = vpop.f32.mrf.mxu0
    %v1561 = vadd.f32 %v1055, %v1560
    %v1562 = vpop.f32.mrf.mxu0
    %1563 = vmatprep.mubr.bf16.mxu0 0
    %1564 = vmatmul.mubr.bf16.gmra.mxu0 %v1480
    %v1565 = vpop.f32.mrf.mxu0
    %v1566 = vadd.f32 %v1055, %v1565
    %v1567 = vpop.f32.mrf.mxu0
    %v1568 = vpop.f32.mrf.mxu0
    %v1569 = vadd.f32 %v1055, %v1568
    %v1570 = vpop.f32.mrf.mxu0
    %1571 = vmatprep.mubr.bf16.mxu0 0
    %1572 = vmatmul.mubr.bf16.gmra.mxu0 %v1481
    %v1573 = vpop.f32.mrf.mxu0
    %v1574 = vadd.f32 %v1055, %v1573
    %v1575 = vpop.f32.mrf.mxu0
    %v1576 = vpop.f32.mrf.mxu0
    %v1577 = vadd.f32 %v1055, %v1576
    %v1578 = vpop.f32.mrf.mxu0
    %1579 = vmatprep.mubr.bf16.mxu0 0
    %1580 = vmatmul.mubr.bf16.gmra.mxu0 %v1482
    %v1581 = vpop.f32.mrf.mxu0
    %v1582 = vadd.f32 %v1055, %v1581
    %v1583 = vpop.f32.mrf.mxu0
    %v1584 = vpop.f32.mrf.mxu0
    %v1585 = vadd.f32 %v1055, %v1584
    %v1586 = vpop.f32.mrf.mxu0
    %1587 = vmatprep.mubr.bf16.mxu0 0
    %1588 = vmatmul.mubr.bf16.gmra.mxu0 %v1483
    %v1589 = vpop.f32.mrf.mxu0
    %v1590 = vadd.f32 %v1055, %v1589
    %v1591 = vpop.f32.mrf.mxu0
    %v1592 = vpop.f32.mrf.mxu0
    %v1593 = vadd.f32 %v1055, %v1592
    %v1594 = vpop.f32.mrf.mxu0
    %1595 = vmatprep.mubr.bf16.mxu0 0
    %1596 = vmatmul.mubr.bf16.gmra.mxu0 %v1484
    %v1597 = vpop.f32.mrf.mxu0
    %v1598 = vadd.f32 %v1055, %v1597
    %v1599 = vpop.f32.mrf.mxu0
    %v1600 = vpop.f32.mrf.mxu0
    %v1601 = vadd.f32 %v1055, %v1600
    %v1602 = vpop.f32.mrf.mxu0
    %1603 = vmatprep.mubr.bf16.mxu0 0
    %1604 = vmatmul.mubr.bf16.gmra.mxu0 %v1485
    %v1605 = vpop.f32.mrf.mxu0
    %v1606 = vadd.f32 %v1055, %v1605
    %v1607 = vpop.f32.mrf.mxu0
    %v1608 = vpop.f32.mrf.mxu0
    %v1609 = vadd.f32 %v1055, %v1608
    %v1610 = vpop.f32.mrf.mxu0
    %1611 = vmatprep.mubr.bf16.mxu0 0
    %1612 = vmatmul.mubr.bf16.gmra.mxu0 %v1486
    %v1613 = vpop.f32.mrf.mxu0
    %v1614 = vadd.f32 %v1055, %v1613
    %v1615 = vpop.f32.mrf.mxu0
    %v1616 = vpop.f32.mrf.mxu0
    %v1617 = vadd.f32 %v1055, %v1616
    %v1618 = vpop.f32.mrf.mxu0
    %1619 = vmatprep.mubr.bf16.mxu0 0
    %1620 = vmatmul.mubr.bf16.gmra.mxu0 %v1487
    %v1621 = vpop.f32.mrf.mxu0
    %v1622 = vadd.f32 %v1055, %v1621
    %v1623 = vpop.f32.mrf.mxu0
    %v1624 = vpop.f32.mrf.mxu0
    %v1625 = vadd.f32 %v1055, %v1624
    %v1626 = vpop.f32.mrf.mxu0
    %1627 = vmatprep.mubr.bf16.mxu0 0
    %1628 = vmatmul.mubr.bf16.gmra.mxu0 %v1488
    %v1629 = vpop.f32.mrf.mxu0
    %v1630 = vadd.f32 %v1055, %v1629
    %v1631 = vpop.f32.mrf.mxu0
    %v1632 = vpop.f32.mrf.mxu0
    %v1633 = vadd.f32 %v1055, %v1632
    %v1634 = vpop.f32.mrf.mxu0
    %1635 = vmatprep.mubr.bf16.mxu0 0
    %1636 = vmatmul.mubr.bf16.gmra.mxu0 %v1489
    %v1637 = vpop.f32.mrf.mxu0
    %v1638 = vadd.f32 %v1055, %v1637
    %v1639 = vpop.f32.mrf.mxu0
    %v1640 = vpop.f32.mrf.mxu0
    %v1641 = vadd.f32 %v1055, %v1640
    %v1642 = vpop.f32.mrf.mxu0
    %1643 = vmatprep.mubr.bf16.mxu0 0
    %1644 = vmatmul.mubr.bf16.gmra.mxu0 %v1490
    %v1645 = vpop.f32.mrf.mxu0
    %v1646 = vadd.f32 %v1055, %v1645
    %v1647 = vpop.f32.mrf.mxu0
    %v1648 = vpop.f32.mrf.mxu0
    %v1649 = vadd.f32 %v1055, %v1648
    %v1650 = vpop.f32.mrf.mxu0
    %1651 = vdwg.mxu0
    %v1652 = vpack.c.bf16 %v1529, %v1526
    %v1653 = vpack.c.bf16 %v1537, %v1534
    %v1654 = vpack.c.bf16 %v1545, %v1542
    %v1655 = vpack.c.bf16 %v1553, %v1550
    %v1656 = vpack.c.bf16 %v1561, %v1558
    %v1657 = vpack.c.bf16 %v1569, %v1566
    %v1658 = vpack.c.bf16 %v1577, %v1574
    %v1659 = vpack.c.bf16 %v1585, %v1582
    %v1660 = vpack.c.bf16 %v1593, %v1590
    %v1661 = vpack.c.bf16 %v1601, %v1598
    %v1662 = vpack.c.bf16 %v1609, %v1606
    %v1663 = vpack.c.bf16 %v1617, %v1614
    %v1664 = vpack.c.bf16 %v1625, %v1622
    %v1665 = vpack.c.bf16 %v1633, %v1630
    %v1666 = vpack.c.bf16 %v1641, %v1638
    %v1667 = vpack.c.bf16 %v1649, %v1646
    %v1684 = vunpack.c.l.b16 %v1652
    %v1685 = vunpack.c.h.b16 %v1652
    %v1686 = vunpack.c.l.b16 %v1653
    %v1687 = vunpack.c.h.b16 %v1653
    %v1688 = vunpack.c.l.b16 %v1654
    %v1689 = vunpack.c.h.b16 %v1654
    %v1690 = vunpack.c.l.b16 %v1655
    %v1691 = vunpack.c.h.b16 %v1655
    %v1692 = vunpack.c.l.b16 %v1656
    %v1693 = vunpack.c.h.b16 %v1656
    %v1694 = vunpack.c.l.b16 %v1657
    %v1695 = vunpack.c.h.b16 %v1657
    %v1696 = vunpack.c.l.b16 %v1658
    %v1697 = vunpack.c.h.b16 %v1658
    %v1698 = vunpack.c.l.b16 %v1659
    %v1699 = vunpack.c.h.b16 %v1659
    %v1700 = vunpack.c.l.b16 %v1660
    %v1701 = vunpack.c.h.b16 %v1660
    %v1702 = vunpack.c.l.b16 %v1661
    %v1703 = vunpack.c.h.b16 %v1661
    %v1704 = vunpack.c.l.b16 %v1662
    %v1705 = vunpack.c.h.b16 %v1662
    %v1706 = vunpack.c.l.b16 %v1663
    %v1707 = vunpack.c.h.b16 %v1663
    %v1708 = vunpack.c.l.b16 %v1664
    %v1709 = vunpack.c.h.b16 %v1664
    %v1710 = vunpack.c.l.b16 %v1665
    %v1711 = vunpack.c.h.b16 %v1665
    %v1712 = vunpack.c.l.b16 %v1666
    %v1713 = vunpack.c.h.b16 %v1666
    %v1714 = vunpack.c.l.b16 %v1667
    %v1715 = vunpack.c.h.b16 %v1667
    %v1716 = vpack.c.b16 %v1684, %v1684
    %v1717 = vpack.c.b16 %v1685, %v1685
    %v1718 = vpack.c.b16 %v1686, %v1686
    %v1719 = vpack.c.b16 %v1687, %v1687
    %v1720 = vpack.c.b16 %v1688, %v1688
    %v1721 = vpack.c.b16 %v1689, %v1689
    %v1722 = vpack.c.b16 %v1690, %v1690
    %v1723 = vpack.c.b16 %v1691, %v1691
    %v1724 = vpack.c.b16 %v1692, %v1692
    %v1725 = vpack.c.b16 %v1693, %v1693
    %v1726 = vpack.c.b16 %v1694, %v1694
    %v1727 = vpack.c.b16 %v1695, %v1695
    %v1728 = vpack.c.b16 %v1696, %v1696
    %v1729 = vpack.c.b16 %v1697, %v1697
    %v1730 = vpack.c.b16 %v1698, %v1698
    %v1731 = vpack.c.b16 %v1699, %v1699
    %v1732 = vpack.c.b16 %v1700, %v1700
    %v1733 = vpack.c.b16 %v1701, %v1701
    %v1734 = vpack.c.b16 %v1702, %v1702
    %v1735 = vpack.c.b16 %v1703, %v1703
    %v1736 = vpack.c.b16 %v1704, %v1704
    %v1737 = vpack.c.b16 %v1705, %v1705
    %v1738 = vpack.c.b16 %v1706, %v1706
    %v1739 = vpack.c.b16 %v1707, %v1707
    %v1740 = vpack.c.b16 %v1708, %v1708
    %v1741 = vpack.c.b16 %v1709, %v1709
    %v1742 = vpack.c.b16 %v1710, %v1710
    %v1743 = vpack.c.b16 %v1711, %v1711
    %v1744 = vpack.c.b16 %v1712, %v1712
    %v1745 = vpack.c.b16 %v1713, %v1713
    %v1746 = vpack.c.b16 %v1714, %v1714
    %v1747 = vpack.c.b16 %v1715, %v1715
    %1780 = vst [vmem:[#allocation10] sm:$0xf] %v1716
    %1781 = vst [vmem:[#allocation10 + $0x4] sm:$0xf] %v1717
    %1782 = vst [vmem:[#allocation10 + $0x8] sm:$0xf] %v1718
    %1783 = vst [vmem:[#allocation10 + $0xc] sm:$0xf] %v1719
    %1784 = vst [vmem:[#allocation10 + $0x10] sm:$0xf] %v1720
    %1785 = vst [vmem:[#allocation10 + $0x14] sm:$0xf] %v1721
    %1786 = vst [vmem:[#allocation10 + $0x18] sm:$0xf] %v1722
    %1787 = vst [vmem:[#allocation10 + $0x1c] sm:$0xf] %v1723
    %1788 = vst [vmem:[#allocation10 + $0x20] sm:$0xf] %v1724
    %1789 = vst [vmem:[#allocation10 + $0x24] sm:$0xf] %v1725
    %1790 = vst [vmem:[#allocation10 + $0x28] sm:$0xf] %v1726
    %1791 = vst [vmem:[#allocation10 + $0x2c] sm:$0xf] %v1727
    %1792 = vst [vmem:[#allocation10 + $0x30] sm:$0xf] %v1728
    %1793 = vst [vmem:[#allocation10 + $0x34] sm:$0xf] %v1729
    %1794 = vst [vmem:[#allocation10 + $0x38] sm:$0xf] %v1730
    %1795 = vst [vmem:[#allocation10 + $0x3c] sm:$0xf] %v1731
    %1796 = vst [vmem:[#allocation10 + $0x40] sm:$0xf] %v1732
    %1797 = vst [vmem:[#allocation10 + $0x44] sm:$0xf] %v1733
    %1798 = vst [vmem:[#allocation10 + $0x48] sm:$0xf] %v1734
    %1799 = vst [vmem:[#allocation10 + $0x4c] sm:$0xf] %v1735
    %1800 = vst [vmem:[#allocation10 + $0x50] sm:$0xf] %v1736
    %1801 = vst [vmem:[#allocation10 + $0x54] sm:$0xf] %v1737
    %1802 = vst [vmem:[#allocation10 + $0x58] sm:$0xf] %v1738
    %1803 = vst [vmem:[#allocation10 + $0x5c] sm:$0xf] %v1739
    %1804 = vst [vmem:[#allocation10 + $0x60] sm:$0xf] %v1740
    %1805 = vst [vmem:[#allocation10 + $0x64] sm:$0xf] %v1741
    %1806 = vst [vmem:[#allocation10 + $0x68] sm:$0xf] %v1742
    %1807 = vst [vmem:[#allocation10 + $0x6c] sm:$0xf] %v1743
    %1808 = vst [vmem:[#allocation10 + $0x70] sm:$0xf] %v1744
    %1809 = vst [vmem:[#allocation10 + $0x74] sm:$0xf] %v1745
    %1810 = vst [vmem:[#allocation10 + $0x78] sm:$0xf] %v1746
    %1811 = vst [vmem:[#allocation10 + $0x7c] sm:$0xf] %v1747
    // Predicated region
    $region42: #{tpu_custom_call.1} parent=1 // pred_check
      _
    $region43: #{tpu_custom_call.1} parent=1 // pred_check_branch
      %1813 = sbr.rel (0) target = $region45
    $region44: #{tpu_custom_call.1} parent=1 // pred_region
      %s1815 = ssub.s32 2048, 2048
      %1816 = vsyncadd [#allocation4], %s1815
      %s1817 = sshll.u32 [#allocation10], 4
      %s1818 = int_to_ptr.vmem [resolvable:$true] %s1817
      %1823 = dma.vmem_to_hbm [thread:$0]  %s1818, 2048, %s6, [#allocation4], 64, 64, 4
    $region45: #{tpu_custom_call.1} parent=1 // pred_fallthru
      _
    // Predicated region
    $region46: #{tpu_custom_call.1} parent=1 // pred_check
      _
    $region47: #{tpu_custom_call.1} parent=1 // pred_check_branch
      %1825 = sbr.rel (0) target = $region49
    $region48: #{tpu_custom_call.1} parent=1 // pred_region
      %1826 = dma.done [#allocation4], 2048
    $region49: #{tpu_custom_call.1} parent=1 // pred_fallthru
      _
    %1827 = vsyncpa [#allocation3], 1
    %1828 = vsyncpa [#allocation6], 1
    %1829 = vsyncpa [#allocation9], 1
    %1830 = vsyncpa [#allocation4], 1

</llo_original>
